<compile_context>
chip_gen: v7x
topology: tpu7x:2x2x1
jax: 0.10.0
libtpu: 0.0.40
codegen_flags: <defaults>
</compile_context>

<pallas_src>
import numpy as np
import jax
import jax.numpy as jnp
from jax.experimental import pallas as pl
from jax.experimental.pallas import tpu as pltpu

EPS = 1e-5


# ------------------------------- Pallas kernel --------------------------------
def _make_kernel(N, H, W, Cin, Cout):
    NH = N * H
    WCin = W * Cin
    WC = W * Cout
    M = N * H * W                     # BN sample count per channel

    def edge_masks(width):
        # intra-image row index h for every element, without integer mod: 3-D iota along the H
        # axis, collapsed to the 2-D (N*H, width) layout (H is a multiple of the sublane tile).
        h = jax.lax.broadcasted_iota(jnp.int32, (N, H, width), 1).reshape(NH, width)
        return h == 0, h == H - 1

    def row_taps(a, top, bot):
        # up/down row neighbours, built in-registers: circular roll (XLU slot, ~free next to the
        # MXU work) + zero the rows that wrapped across an image boundary (one VPU select each).
        n = a.shape[0]
        up = jnp.where(top, 0.0, pltpu.roll(a, shift=1, axis=0))      # row r <- a[r-1]
        dn = jnp.where(bot, 0.0, pltpu.roll(a, shift=n - 1, axis=0))  # row r <- a[r+1]
        return up, dn

    def stack2(a, b):
        # stack two (1, C) rows into a (2, C) value via broadcast+select (avoids sub-tile concat)
        r = jax.lax.broadcasted_iota(jnp.int32, (2, a.shape[-1]), 0)
        return jnp.where(r == 0, a, b)

    def bn_train(y, sel, selt, gamma, beta):
        """Training-mode BN on a lane-dense (rows, W*Cout) activation; stats per channel.

        Single pass (sum & sum-of-squares, biased var clamped >= 0); the selector matmuls are
        batched into one (2,WC)@sel dot and one (2,Cout)@selt dot.
        TODO(synk): on real data with |mean| >> std, switch to a shifted / two-pass variance.
        """
        col = stack2(jnp.sum(y, axis=0, keepdims=True),
                     jnp.sum(y * y, axis=0, keepdims=True))               # (2, WC)
        ch = jnp.dot(col, sel, preferred_element_type=jnp.float32)        # (2, Cout)
        mean = ch[0:1] * (1.0 / M)
        var = jnp.maximum(ch[1:2] * (1.0 / M) - mean * mean, 0.0)
        scale = gamma * jax.lax.rsqrt(var + EPS)                          # (1, Cout)
        shift = beta - mean * scale
        ss = jnp.dot(stack2(scale, shift), selt,
                     preferred_element_type=jnp.float32)                  # (2, WC)
        return y * ss[0:1] + ss[1:2]

    def kernel(x_ref, t1_ref, t2_ref, ta_ref, sel_ref, selt_ref, gb_ref, out_ref, feat_ref):
        sel, selt = sel_ref[...], selt_ref[...]
        gb = gb_ref[...]                                  # (6, Cout): g1,b1,g2,b2,ga,ba
        top_i, bot_i = edge_masks(WCin)
        top_o, bot_o = edge_masks(WC)

        # ---- conv1 (3x3, pad 1): taps built in-registers; 64-wide taps -> keep 3 per-tap dots
        #      (avoids an unaligned lane concat), no wrapper-side xcat slab in HBM. ----
        x = x_ref[...]                                    # (N*H, W*Cin)
        x_up, x_dn = row_taps(x, top_i, bot_i)
        acc1 = (jnp.dot(x_up, t1_ref[0], preferred_element_type=jnp.float32)
                + jnp.dot(x, t1_ref[1], preferred_element_type=jnp.float32)
                + jnp.dot(x_dn, t1_ref[2], preferred_element_type=jnp.float32))
        y = jnp.maximum(bn_train(acc1, sel, selt, gb[0:1], gb[1:2]), 0.0)

        # ---- conv2 (3x3, pad 1): middle tap fed straight from y (already in vregs); the three
        #      128-wide taps concat lane-aligned -> ONE fused K=3*W*Cout matmul. ----
        y_up, y_dn = row_taps(y, top_o, bot_o)
        ycat = jnp.concatenate([y_up, y, y_dn], axis=-1)  # (N*H, 3*W*Cout)
        acc2 = jnp.dot(ycat, t2_ref[...], preferred_element_type=jnp.float32)
        feat = bn_train(acc2, sel, selt, gb[2:3], gb[3:4])

        # ---- channel_align residual: 1x1 conv (block-diagonal matmul) + BN ----
        res = bn_train(jnp.dot(x, ta_ref[...], preferred_element_type=jnp.float32),
                       sel, selt, gb[4:5], gb[5:6])

        # ---- residual add + relu; lane-dense stores (last dim = W*Cout = 128, unmasked) ----
        out_ref[...] = jnp.maximum(feat + res, 0.0)
        feat_ref[...] = feat

    return kernel


# ----------------------- wrapper-side weight/layout plumbing -------------------
def _banded_weight(w_hwio, W):
    """(3, 3, Ci, Co) conv weight -> (3, W*Ci, W*Co) block-banded slabs (conv along W as matmul)."""
    _, _, Ci, Co = w_hwio.shape
    p = np.arange(W)[:, None, None]
    d = np.arange(3)[None, :, None]
    q = np.arange(W)[None, None, :]
    band = jnp.asarray((p == q + d - 1).astype(np.float32))      # (W, 3, W)
    t = jnp.einsum('pdq,ydio->ypiqo', band, w_hwio)              # (3, W, Ci, W, Co)
    return t.reshape(3, W * Ci, W * Co)


def _blockdiag_weight(wa, W):
    """(Ci, Co) 1x1-conv weight -> (W*Ci, W*Co) block-diagonal slab."""
    Ci, Co = wa.shape
    eye = jnp.asarray(np.eye(W, dtype=np.float32))
    t = jnp.einsum('pq,io->piqo', eye, wa)                       # (W, Ci, W, Co)
    return t.reshape(W * Ci, W * Co)


def residual_block(x_nchw, params):
    N, Cin, H, W = x_nchw.shape
    Cout = params["w1"].shape[-1]
    WC = W * Cout
    # hard layout assumptions of the lane-dense design — fail loudly instead of silently breaking
    assert WC == 128, "kernel assumes W*Cout == 128 (rows map exactly onto the 128-lane axis)"
    assert W * Cin <= 128, "kernel assumes W*Cin fits within one lane tile"

    # glue: NCHW -> lane-dense 2D slab (pure layout plumbing in XLA; no compute hoisted, no xcat)
    x2d = jnp.transpose(x_nchw, (0, 2, 3, 1)).astype(jnp.float32).reshape(N * H, W * Cin)

    # weights as banded / block-diagonal matmul slabs + BN channel selector matrices
    t1 = _banded_weight(params["w1"], W)                          # (3, W*Cin, W*Cout), per-tap
    t2 = _banded_weight(params["w2"], W).reshape(3 * WC, WC)      # (3*W*Cout, W*Cout), fused K
    ta = _blockdiag_weight(params["wa"], W)                       # (W*Cin, W*Cout)
    sel_np = np.tile(np.eye(Cout, dtype=np.float32), (W, 1))      # lane <-> channel selectors
    sel, selt = jnp.asarray(sel_np), jnp.asarray(sel_np.T)
    gb = jnp.concatenate([params["g1"], params["b1"], params["g2"], params["b2"],
                          params["ga"], params["ba"]], axis=0)    # (6, Cout) packed BN params

    vmem = pl.BlockSpec(memory_space=pltpu.MemorySpace.VMEM)
    kernel = _make_kernel(N, H, W, Cin, Cout)

    # TODO(synk): for large N/H/W add a grid over batch / H row-tiles (1-row halo) with
    # dimension_semantics=("parallel", ...) and two-phase BN (per-tile partial sum/sum-sq +
    # finalize) so both v7x TensorCores are used and tiles stay inside VMEM; cast matmul
    # operands to bf16 once Cin/Cout reach MXU-native widths.  At this toy size a single
    # program fits comfortably and f32 keeps the tolerance margin.
    out2d, feat2d = pl.pallas_call(
        kernel,
        out_shape=(jax.ShapeDtypeStruct((N * H, WC), jnp.float32),
                   jax.ShapeDtypeStruct((N * H, WC), jnp.float32)),
        in_specs=[vmem] * 7,
        out_specs=(vmem, vmem),
    )(x2d, t1, t2, ta, sel, selt, gb)

    out = jnp.transpose(out2d.reshape(N, H, W, Cout), (0, 3, 1, 2))   # back to PyTorch NCHW
    feat = jnp.transpose(feat2d.reshape(N, H, W, Cout), (0, 3, 1, 2))
    return out, feat


# ------------------------- deterministic parameter init -----------------------
def init_params(key, cin, cout):
    k1, k2, k3 = jax.random.split(key, 3)
    std3 = (2.0 / (cout * 3 * 3)) ** 0.5      # kaiming_normal, fan_out, relu
    std1 = (2.0 / (cout * 1 * 1)) ** 0.5
    return {
        # conv weights stored HWIO (3,3,Cin,Cout) — equivalent to torch OIHW weights.
        "w1": jax.random.normal(k1, (3, 3, cin, cout), jnp.float32) * std3,
        "w2": jax.random.normal(k2, (3, 3, cout, cout), jnp.float32) * std3,
        "wa": jax.random.normal(k3, (cin, cout), jnp.float32) * std1,
        "g1": jnp.ones((1, cout), jnp.float32), "b1": jnp.zeros((1, cout), jnp.float32),
        "g2": jnp.ones((1, cout), jnp.float32), "b2": jnp.zeros((1, cout), jnp.float32),
        "ga": jnp.ones((1, cout), jnp.float32), "ba": jnp.zeros((1, cout), jnp.float32),
    }


# ------------------------------ pure-JAX reference -----------------------------
def _conv3x3_ref(xpad, w):
    N, Hp, Wp, _ = xpad.shape
    H, W = Hp - 2, Wp - 2
    out = 0.0
    for dy in range(3):
        for dx in range(3):
            out = out + jnp.einsum('nhwc,co->nhwo',
                                   xpad[:, dy:dy + H, dx:dx + W, :], w[dy, dx])
    return out


def _bn_ref(y, g, b):
    mean = y.mean(axis=(0, 1, 2), keepdims=True)
    var = ((y - mean) ** 2).mean(axis=(0, 1, 2), keepdims=True)
    return (y - mean) * jax.lax.rsqrt(var + EPS) * g + b


def reference(x_nchw, p):
    x = jnp.transpose(x_nchw, (0, 2, 3, 1)).astype(jnp.float32)
    xpad = jnp.pad(x, ((0, 0), (1, 1), (1, 1), (0, 0)))
    y = jnp.maximum(_bn_ref(_conv3x3_ref(xpad, p["w1"]),
                            p["g1"].reshape(1, 1, 1, -1), p["b1"].reshape(1, 1, 1, -1)), 0.0)
    ypad = jnp.pad(y, ((0, 0), (1, 1), (1, 1), (0, 0)))
    feat = _bn_ref(_conv3x3_ref(ypad, p["w2"]),
                   p["g2"].reshape(1, 1, 1, -1), p["b2"].reshape(1, 1, 1, -1))
    res = _bn_ref(jnp.einsum('nhwc,co->nhwo', x, p["wa"]),
                  p["ga"].reshape(1, 1, 1, -1), p["ba"].reshape(1, 1, 1, -1))
    out = jnp.maximum(feat + res, 0.0)
    return jnp.transpose(out, (0, 3, 1, 2)), jnp.transpose(feat, (0, 3, 1, 2))


# ----------------------------------- main --------------------------------------
if __name__ == "__main__":
    key = jax.random.PRNGKey(0)
    kx, kp = jax.random.split(key)

    in_channels, out_channels = 4, 8
    N, H, W = 2, 16, 16
    x = jax.random.normal(kx, (N, in_channels, H, W), jnp.float32)
    params = init_params(kp, in_channels, out_channels)

    out, feat = residual_block(x, params)
    out = jax.block_until_ready(out)
    feat = jax.block_until_ready(feat)

    ref_out, ref_feat = reference(x, params)
    assert out.shape == (N, out_channels, H, W) and feat.shape == (N, out_channels, H, W)
    assert jnp.allclose(out, ref_out, atol=2e-2, rtol=2e-2), "out mismatch"
    assert jnp.allclose(feat, ref_feat, atol=2e-2, rtol=2e-2), "feat mismatch"

    print("KERNEL_OK")
</pallas_src>

<mosaic_0001>
module attributes {stable_mosaic.version = 11 : i64} {
  func.func @kernel(%arg0: memref<32x64xf32, #tpu.memory_space<vmem>>, %arg1: memref<3x64x128xf32, #tpu.memory_space<vmem>>, %arg2: memref<384x128xf32, #tpu.memory_space<vmem>>, %arg3: memref<64x128xf32, #tpu.memory_space<vmem>>, %arg4: memref<128x8xf32, #tpu.memory_space<vmem>>, %arg5: memref<8x128xf32, #tpu.memory_space<vmem>>, %arg6: memref<6x8xf32, #tpu.memory_space<vmem>>, %arg7: memref<32x128xf32, #tpu.memory_space<vmem>>, %arg8: memref<32x128xf32, #tpu.memory_space<vmem>>) attributes {dimension_semantics = [], scalar_prefetch = 0 : i64, scratch_operands = 0 : i64, tpu.core_type = #tpu.core_type<tc>} {
    %c0 = arith.constant 0 : index
    %c0_0 = arith.constant 0 : index
    %0 = vector.load %arg4[%c0, %c0_0] : memref<128x8xf32, #tpu.memory_space<vmem>>, vector<128x8xf32>
    %c0_1 = arith.constant 0 : index
    %c0_2 = arith.constant 0 : index
    %1 = vector.load %arg5[%c0_1, %c0_2] : memref<8x128xf32, #tpu.memory_space<vmem>>, vector<8x128xf32>
    %c0_3 = arith.constant 0 : index
    %c0_4 = arith.constant 0 : index
    %2 = vector.load %arg6[%c0_3, %c0_4] : memref<6x8xf32, #tpu.memory_space<vmem>>, vector<6x8xf32>
    %3 = tpu.iota {dimensions = array<i32: 1>} : vector<2x16x64xi32>
    %4 = vector.shape_cast %3 : vector<2x16x64xi32> to vector<32x64xi32>
    %c0_i32 = arith.constant 0 : i32
    %5 = vector.broadcast %c0_i32 : i32 to vector<32x64xi32>
    %6 = arith.cmpi eq, %4, %5 : vector<32x64xi32>
    %c15_i32 = arith.constant 15 : i32
    %7 = vector.broadcast %c15_i32 : i32 to vector<32x64xi32>
    %8 = arith.cmpi eq, %4, %7 : vector<32x64xi32>
    %9 = tpu.iota {dimensions = array<i32: 1>} : vector<2x16x128xi32>
    %10 = vector.shape_cast %9 : vector<2x16x128xi32> to vector<32x128xi32>
    %c0_i32_5 = arith.constant 0 : i32
    %11 = vector.broadcast %c0_i32_5 : i32 to vector<32x128xi32>
    %12 = arith.cmpi eq, %10, %11 : vector<32x128xi32>
    %c15_i32_6 = arith.constant 15 : i32
    %13 = vector.broadcast %c15_i32_6 : i32 to vector<32x128xi32>
    %14 = arith.cmpi eq, %10, %13 : vector<32x128xi32>
    %c0_7 = arith.constant 0 : index
    %c0_8 = arith.constant 0 : index
    %15 = vector.load %arg0[%c0_7, %c0_8] : memref<32x64xf32, #tpu.memory_space<vmem>>, vector<32x64xf32>
    %c1_i32 = arith.constant 1 : i32
    %16 = tpu.dynamic_rotate %15 by %c1_i32 dim 0 : vector<32x64xf32>, i32 -> vector<32x64xf32>
    %cst = arith.constant 0.000000e+00 : f32
    %17 = vector.broadcast %cst : f32 to vector<32x64xf32>
    %18 = arith.select %6, %17, %16 : vector<32x64xi1>, vector<32x64xf32>
    %c31_i32 = arith.constant 31 : i32
    %19 = tpu.dynamic_rotate %15 by %c31_i32 dim 0 : vector<32x64xf32>, i32 -> vector<32x64xf32>
    %cst_9 = arith.constant 0.000000e+00 : f32
    %20 = vector.broadcast %cst_9 : f32 to vector<32x64xf32>
    %21 = arith.select %8, %20, %19 : vector<32x64xi1>, vector<32x64xf32>
    %c0_10 = arith.constant 0 : index
    %c0_11 = arith.constant 0 : index
    %c0_12 = arith.constant 0 : index
    %22 = vector.load %arg1[%c0_10, %c0_11, %c0_12] : memref<3x64x128xf32, #tpu.memory_space<vmem>>, vector<1x64x128xf32>
    %23 = vector.shape_cast %22 : vector<1x64x128xf32> to vector<64x128xf32>
    %cst_13 = arith.constant dense<0.000000e+00> : vector<32x128xf32>
    %24 = tpu.matmul %18, %23, %cst_13 {dimension_numbers = #tpu.dot_dimension_numbers<[1], [0], [0], [1], [0, 0, 1, 1], [], []>} : vector<32x64xf32>, vector<64x128xf32>, vector<32x128xf32> -> vector<32x128xf32>
    %c1 = arith.constant 1 : index
    %c0_14 = arith.constant 0 : index
    %c0_15 = arith.constant 0 : index
    %25 = vector.load %arg1[%c1, %c0_14, %c0_15] : memref<3x64x128xf32, #tpu.memory_space<vmem>>, vector<1x64x128xf32>
    %26 = vector.shape_cast %25 : vector<1x64x128xf32> to vector<64x128xf32>
    %cst_16 = arith.constant dense<0.000000e+00> : vector<32x128xf32>
    %27 = tpu.matmul %15, %26, %cst_16 {dimension_numbers = #tpu.dot_dimension_numbers<[1], [0], [0], [1], [0, 0, 1, 1], [], []>} : vector<32x64xf32>, vector<64x128xf32>, vector<32x128xf32> -> vector<32x128xf32>
    %28 = arith.addf %24, %27 : vector<32x128xf32>
    %c2 = arith.constant 2 : index
    %c0_17 = arith.constant 0 : index
    %c0_18 = arith.constant 0 : index
    %29 = vector.load %arg1[%c2, %c0_17, %c0_18] : memref<3x64x128xf32, #tpu.memory_space<vmem>>, vector<1x64x128xf32>
    %30 = vector.shape_cast %29 : vector<1x64x128xf32> to vector<64x128xf32>
    %cst_19 = arith.constant dense<0.000000e+00> : vector<32x128xf32>
    %31 = tpu.matmul %21, %30, %cst_19 {dimension_numbers = #tpu.dot_dimension_numbers<[1], [0], [0], [1], [0, 0, 1, 1], [], []>} : vector<32x64xf32>, vector<64x128xf32>, vector<32x128xf32> -> vector<32x128xf32>
    %32 = arith.addf %28, %31 : vector<32x128xf32>
    %33 = vector.extract_strided_slice %2 {offsets = [0, 0], sizes = [1, 8], strides = [1, 1]} : vector<6x8xf32> to vector<1x8xf32>
    %34 = vector.extract_strided_slice %2 {offsets = [1, 0], sizes = [1, 8], strides = [1, 1]} : vector<6x8xf32> to vector<1x8xf32>
    %cst_20 = arith.constant dense<0.000000e+00> : vector<128xf32>
    %35 = vector.multi_reduction <add>, %32, %cst_20 [0] : vector<32x128xf32> to vector<128xf32>
    %36 = vector.shape_cast %35 : vector<128xf32> to vector<1x128xf32>
    %37 = arith.mulf %32, %32 : vector<32x128xf32>
    %cst_21 = arith.constant dense<0.000000e+00> : vector<128xf32>
    %38 = vector.multi_reduction <add>, %37, %cst_21 [0] : vector<32x128xf32> to vector<128xf32>
    %39 = vector.shape_cast %38 : vector<128xf32> to vector<1x128xf32>
    %40 = tpu.iota {dimensions = array<i32: 0>} : vector<2x128xi32>
    %c0_i32_22 = arith.constant 0 : i32
    %41 = vector.broadcast %c0_i32_22 : i32 to vector<2x128xi32>
    %42 = arith.cmpi eq, %40, %41 : vector<2x128xi32>
    %43 = vector.shape_cast %36 : vector<1x128xf32> to vector<1x128xf32>
    %44 = vector.broadcast %43 : vector<1x128xf32> to vector<2x128xf32>
    %45 = vector.shape_cast %39 : vector<1x128xf32> to vector<1x128xf32>
    %46 = vector.broadcast %45 : vector<1x128xf32> to vector<2x128xf32>
    %47 = arith.select %42, %44, %46 : vector<2x128xi1>, vector<2x128xf32>
    %cst_23 = arith.constant dense<0.000000e+00> : vector<2x8xf32>
    %48 = tpu.matmul %47, %0, %cst_23 {dimension_numbers = #tpu.dot_dimension_numbers<[1], [0], [0], [1], [0, 0, 1, 1], [], []>} : vector<2x128xf32>, vector<128x8xf32>, vector<2x8xf32> -> vector<2x8xf32>
    %49 = vector.extract_strided_slice %48 {offsets = [0, 0], sizes = [1, 8], strides = [1, 1]} : vector<2x8xf32> to vector<1x8xf32>
    %cst_24 = arith.constant 0.001953125 : f32
    %50 = vector.broadcast %cst_24 : f32 to vector<1x8xf32>
    %51 = arith.mulf %49, %50 : vector<1x8xf32>
    %52 = vector.extract_strided_slice %48 {offsets = [1, 0], sizes = [1, 8], strides = [1, 1]} : vector<2x8xf32> to vector<1x8xf32>
    %cst_25 = arith.constant 0.001953125 : f32
    %53 = vector.broadcast %cst_25 : f32 to vector<1x8xf32>
    %54 = arith.mulf %52, %53 : vector<1x8xf32>
    %55 = arith.mulf %51, %51 : vector<1x8xf32>
    %56 = arith.subf %54, %55 : vector<1x8xf32>
    %cst_26 = arith.constant 0.000000e+00 : f32
    %57 = vector.broadcast %cst_26 : f32 to vector<1x8xf32>
    %58 = arith.maximumf %56, %57 : vector<1x8xf32>
    %cst_27 = arith.constant 9.99999974E-6 : f32
    %59 = vector.broadcast %cst_27 : f32 to vector<1x8xf32>
    %60 = arith.addf %58, %59 : vector<1x8xf32>
    %61 = math.rsqrt %60 : vector<1x8xf32>
    %62 = arith.mulf %33, %61 : vector<1x8xf32>
    %63 = arith.mulf %51, %62 : vector<1x8xf32>
    %64 = arith.subf %34, %63 : vector<1x8xf32>
    %65 = tpu.iota {dimensions = array<i32: 0>} : vector<2x8xi32>
    %c0_i32_28 = arith.constant 0 : i32
    %66 = vector.broadcast %c0_i32_28 : i32 to vector<2x8xi32>
    %67 = arith.cmpi eq, %65, %66 : vector<2x8xi32>
    %68 = vector.shape_cast %62 : vector<1x8xf32> to vector<1x8xf32>
    %69 = vector.broadcast %68 : vector<1x8xf32> to vector<2x8xf32>
    %70 = vector.shape_cast %64 : vector<1x8xf32> to vector<1x8xf32>
    %71 = vector.broadcast %70 : vector<1x8xf32> to vector<2x8xf32>
    %72 = arith.select %67, %69, %71 : vector<2x8xi1>, vector<2x8xf32>
    %cst_29 = arith.constant dense<0.000000e+00> : vector<2x128xf32>
    %73 = tpu.matmul %72, %1, %cst_29 {dimension_numbers = #tpu.dot_dimension_numbers<[1], [0], [0], [1], [0, 0, 1, 1], [], []>} : vector<2x8xf32>, vector<8x128xf32>, vector<2x128xf32> -> vector<2x128xf32>
    %74 = vector.extract_strided_slice %73 {offsets = [0, 0], sizes = [1, 128], strides = [1, 1]} : vector<2x128xf32> to vector<1x128xf32>
    %75 = vector.broadcast %74 : vector<1x128xf32> to vector<32x128xf32>
    %76 = arith.mulf %32, %75 : vector<32x128xf32>
    %77 = vector.extract_strided_slice %73 {offsets = [1, 0], sizes = [1, 128], strides = [1, 1]} : vector<2x128xf32> to vector<1x128xf32>
    %78 = vector.broadcast %77 : vector<1x128xf32> to vector<32x128xf32>
    %79 = arith.addf %76, %78 : vector<32x128xf32>
    %cst_30 = arith.constant 0.000000e+00 : f32
    %80 = vector.broadcast %cst_30 : f32 to vector<32x128xf32>
    %81 = arith.maximumf %79, %80 : vector<32x128xf32>
    %c1_i32_31 = arith.constant 1 : i32
    %82 = tpu.dynamic_rotate %81 by %c1_i32_31 dim 0 : vector<32x128xf32>, i32 -> vector<32x128xf32>
    %cst_32 = arith.constant 0.000000e+00 : f32
    %83 = vector.broadcast %cst_32 : f32 to vector<32x128xf32>
    %84 = arith.select %12, %83, %82 : vector<32x128xi1>, vector<32x128xf32>
    %c31_i32_33 = arith.constant 31 : i32
    %85 = tpu.dynamic_rotate %81 by %c31_i32_33 dim 0 : vector<32x128xf32>, i32 -> vector<32x128xf32>
    %cst_34 = arith.constant 0.000000e+00 : f32
    %86 = vector.broadcast %cst_34 : f32 to vector<32x128xf32>
    %87 = arith.select %14, %86, %85 : vector<32x128xi1>, vector<32x128xf32>
    %88 = tpu.concatenate %84, %81, %87 in 1 : vector<32x128xf32>, vector<32x128xf32>, vector<32x128xf32> -> vector<32x384xf32>
    %c0_35 = arith.constant 0 : index
    %c0_36 = arith.constant 0 : index
    %89 = vector.load %arg2[%c0_35, %c0_36] : memref<384x128xf32, #tpu.memory_space<vmem>>, vector<384x128xf32>
    %cst_37 = arith.constant dense<0.000000e+00> : vector<32x128xf32>
    %90 = tpu.matmul %88, %89, %cst_37 {dimension_numbers = #tpu.dot_dimension_numbers<[1], [0], [0], [1], [0, 0, 1, 1], [], []>} : vector<32x384xf32>, vector<384x128xf32>, vector<32x128xf32> -> vector<32x128xf32>
    %91 = vector.extract_strided_slice %2 {offsets = [2, 0], sizes = [1, 8], strides = [1, 1]} : vector<6x8xf32> to vector<1x8xf32>
    %92 = vector.extract_strided_slice %2 {offsets = [3, 0], sizes = [1, 8], strides = [1, 1]} : vector<6x8xf32> to vector<1x8xf32>
    %cst_38 = arith.constant dense<0.000000e+00> : vector<128xf32>
    %93 = vector.multi_reduction <add>, %90, %cst_38 [0] : vector<32x128xf32> to vector<128xf32>
    %94 = vector.shape_cast %93 : vector<128xf32> to vector<1x128xf32>
    %95 = arith.mulf %90, %90 : vector<32x128xf32>
    %cst_39 = arith.constant dense<0.000000e+00> : vector<128xf32>
    %96 = vector.multi_reduction <add>, %95, %cst_39 [0] : vector<32x128xf32> to vector<128xf32>
    %97 = vector.shape_cast %96 : vector<128xf32> to vector<1x128xf32>
    %98 = tpu.iota {dimensions = array<i32: 0>} : vector<2x128xi32>
    %c0_i32_40 = arith.constant 0 : i32
    %99 = vector.broadcast %c0_i32_40 : i32 to vector<2x128xi32>
    %100 = arith.cmpi eq, %98, %99 : vector<2x128xi32>
    %101 = vector.shape_cast %94 : vector<1x128xf32> to vector<1x128xf32>
    %102 = vector.broadcast %101 : vector<1x128xf32> to vector<2x128xf32>
    %103 = vector.shape_cast %97 : vector<1x128xf32> to vector<1x128xf32>
    %104 = vector.broadcast %103 : vector<1x128xf32> to vector<2x128xf32>
    %105 = arith.select %100, %102, %104 : vector<2x128xi1>, vector<2x128xf32>
    %cst_41 = arith.constant dense<0.000000e+00> : vector<2x8xf32>
    %106 = tpu.matmul %105, %0, %cst_41 {dimension_numbers = #tpu.dot_dimension_numbers<[1], [0], [0], [1], [0, 0, 1, 1], [], []>} : vector<2x128xf32>, vector<128x8xf32>, vector<2x8xf32> -> vector<2x8xf32>
    %107 = vector.extract_strided_slice %106 {offsets = [0, 0], sizes = [1, 8], strides = [1, 1]} : vector<2x8xf32> to vector<1x8xf32>
    %cst_42 = arith.constant 0.001953125 : f32
    %108 = vector.broadcast %cst_42 : f32 to vector<1x8xf32>
    %109 = arith.mulf %107, %108 : vector<1x8xf32>
    %110 = vector.extract_strided_slice %106 {offsets = [1, 0], sizes = [1, 8], strides = [1, 1]} : vector<2x8xf32> to vector<1x8xf32>
    %cst_43 = arith.constant 0.001953125 : f32
    %111 = vector.broadcast %cst_43 : f32 to vector<1x8xf32>
    %112 = arith.mulf %110, %111 : vector<1x8xf32>
    %113 = arith.mulf %109, %109 : vector<1x8xf32>
    %114 = arith.subf %112, %113 : vector<1x8xf32>
    %cst_44 = arith.constant 0.000000e+00 : f32
    %115 = vector.broadcast %cst_44 : f32 to vector<1x8xf32>
    %116 = arith.maximumf %114, %115 : vector<1x8xf32>
    %cst_45 = arith.constant 9.99999974E-6 : f32
    %117 = vector.broadcast %cst_45 : f32 to vector<1x8xf32>
    %118 = arith.addf %116, %117 : vector<1x8xf32>
    %119 = math.rsqrt %118 : vector<1x8xf32>
    %120 = arith.mulf %91, %119 : vector<1x8xf32>
    %121 = arith.mulf %109, %120 : vector<1x8xf32>
    %122 = arith.subf %92, %121 : vector<1x8xf32>
    %123 = tpu.iota {dimensions = array<i32: 0>} : vector<2x8xi32>
    %c0_i32_46 = arith.constant 0 : i32
    %124 = vector.broadcast %c0_i32_46 : i32 to vector<2x8xi32>
    %125 = arith.cmpi eq, %123, %124 : vector<2x8xi32>
    %126 = vector.shape_cast %120 : vector<1x8xf32> to vector<1x8xf32>
    %127 = vector.broadcast %126 : vector<1x8xf32> to vector<2x8xf32>
    %128 = vector.shape_cast %122 : vector<1x8xf32> to vector<1x8xf32>
    %129 = vector.broadcast %128 : vector<1x8xf32> to vector<2x8xf32>
    %130 = arith.select %125, %127, %129 : vector<2x8xi1>, vector<2x8xf32>
    %cst_47 = arith.constant dense<0.000000e+00> : vector<2x128xf32>
    %131 = tpu.matmul %130, %1, %cst_47 {dimension_numbers = #tpu.dot_dimension_numbers<[1], [0], [0], [1], [0, 0, 1, 1], [], []>} : vector<2x8xf32>, vector<8x128xf32>, vector<2x128xf32> -> vector<2x128xf32>
    %132 = vector.extract_strided_slice %131 {offsets = [0, 0], sizes = [1, 128], strides = [1, 1]} : vector<2x128xf32> to vector<1x128xf32>
    %133 = vector.broadcast %132 : vector<1x128xf32> to vector<32x128xf32>
    %134 = arith.mulf %90, %133 : vector<32x128xf32>
    %135 = vector.extract_strided_slice %131 {offsets = [1, 0], sizes = [1, 128], strides = [1, 1]} : vector<2x128xf32> to vector<1x128xf32>
    %136 = vector.broadcast %135 : vector<1x128xf32> to vector<32x128xf32>
    %137 = arith.addf %134, %136 : vector<32x128xf32>
    %c0_48 = arith.constant 0 : index
    %c0_49 = arith.constant 0 : index
    %138 = vector.load %arg3[%c0_48, %c0_49] : memref<64x128xf32, #tpu.memory_space<vmem>>, vector<64x128xf32>
    %cst_50 = arith.constant dense<0.000000e+00> : vector<32x128xf32>
    %139 = tpu.matmul %15, %138, %cst_50 {dimension_numbers = #tpu.dot_dimension_numbers<[1], [0], [0], [1], [0, 0, 1, 1], [], []>} : vector<32x64xf32>, vector<64x128xf32>, vector<32x128xf32> -> vector<32x128xf32>
    %140 = vector.extract_strided_slice %2 {offsets = [4, 0], sizes = [1, 8], strides = [1, 1]} : vector<6x8xf32> to vector<1x8xf32>
    %141 = vector.extract_strided_slice %2 {offsets = [5, 0], sizes = [1, 8], strides = [1, 1]} : vector<6x8xf32> to vector<1x8xf32>
    %cst_51 = arith.constant dense<0.000000e+00> : vector<128xf32>
    %142 = vector.multi_reduction <add>, %139, %cst_51 [0] : vector<32x128xf32> to vector<128xf32>
    %143 = vector.shape_cast %142 : vector<128xf32> to vector<1x128xf32>
    %144 = arith.mulf %139, %139 : vector<32x128xf32>
    %cst_52 = arith.constant dense<0.000000e+00> : vector<128xf32>
    %145 = vector.multi_reduction <add>, %144, %cst_52 [0] : vector<32x128xf32> to vector<128xf32>
    %146 = vector.shape_cast %145 : vector<128xf32> to vector<1x128xf32>
    %147 = tpu.iota {dimensions = array<i32: 0>} : vector<2x128xi32>
    %c0_i32_53 = arith.constant 0 : i32
    %148 = vector.broadcast %c0_i32_53 : i32 to vector<2x128xi32>
    %149 = arith.cmpi eq, %147, %148 : vector<2x128xi32>
    %150 = vector.shape_cast %143 : vector<1x128xf32> to vector<1x128xf32>
    %151 = vector.broadcast %150 : vector<1x128xf32> to vector<2x128xf32>
    %152 = vector.shape_cast %146 : vector<1x128xf32> to vector<1x128xf32>
    %153 = vector.broadcast %152 : vector<1x128xf32> to vector<2x128xf32>
    %154 = arith.select %149, %151, %153 : vector<2x128xi1>, vector<2x128xf32>
    %cst_54 = arith.constant dense<0.000000e+00> : vector<2x8xf32>
    %155 = tpu.matmul %154, %0, %cst_54 {dimension_numbers = #tpu.dot_dimension_numbers<[1], [0], [0], [1], [0, 0, 1, 1], [], []>} : vector<2x128xf32>, vector<128x8xf32>, vector<2x8xf32> -> vector<2x8xf32>
    %156 = vector.extract_strided_slice %155 {offsets = [0, 0], sizes = [1, 8], strides = [1, 1]} : vector<2x8xf32> to vector<1x8xf32>
    %cst_55 = arith.constant 0.001953125 : f32
    %157 = vector.broadcast %cst_55 : f32 to vector<1x8xf32>
    %158 = arith.mulf %156, %157 : vector<1x8xf32>
    %159 = vector.extract_strided_slice %155 {offsets = [1, 0], sizes = [1, 8], strides = [1, 1]} : vector<2x8xf32> to vector<1x8xf32>
    %cst_56 = arith.constant 0.001953125 : f32
    %160 = vector.broadcast %cst_56 : f32 to vector<1x8xf32>
    %161 = arith.mulf %159, %160 : vector<1x8xf32>
    %162 = arith.mulf %158, %158 : vector<1x8xf32>
    %163 = arith.subf %161, %162 : vector<1x8xf32>
    %cst_57 = arith.constant 0.000000e+00 : f32
    %164 = vector.broadcast %cst_57 : f32 to vector<1x8xf32>
    %165 = arith.maximumf %163, %164 : vector<1x8xf32>
    %cst_58 = arith.constant 9.99999974E-6 : f32
    %166 = vector.broadcast %cst_58 : f32 to vector<1x8xf32>
    %167 = arith.addf %165, %166 : vector<1x8xf32>
    %168 = math.rsqrt %167 : vector<1x8xf32>
    %169 = arith.mulf %140, %168 : vector<1x8xf32>
    %170 = arith.mulf %158, %169 : vector<1x8xf32>
    %171 = arith.subf %141, %170 : vector<1x8xf32>
    %172 = tpu.iota {dimensions = array<i32: 0>} : vector<2x8xi32>
    %c0_i32_59 = arith.constant 0 : i32
    %173 = vector.broadcast %c0_i32_59 : i32 to vector<2x8xi32>
    %174 = arith.cmpi eq, %172, %173 : vector<2x8xi32>
    %175 = vector.shape_cast %169 : vector<1x8xf32> to vector<1x8xf32>
    %176 = vector.broadcast %175 : vector<1x8xf32> to vector<2x8xf32>
    %177 = vector.shape_cast %171 : vector<1x8xf32> to vector<1x8xf32>
    %178 = vector.broadcast %177 : vector<1x8xf32> to vector<2x8xf32>
    %179 = arith.select %174, %176, %178 : vector<2x8xi1>, vector<2x8xf32>
    %cst_60 = arith.constant dense<0.000000e+00> : vector<2x128xf32>
    %180 = tpu.matmul %179, %1, %cst_60 {dimension_numbers = #tpu.dot_dimension_numbers<[1], [0], [0], [1], [0, 0, 1, 1], [], []>} : vector<2x8xf32>, vector<8x128xf32>, vector<2x128xf32> -> vector<2x128xf32>
    %181 = vector.extract_strided_slice %180 {offsets = [0, 0], sizes = [1, 128], strides = [1, 1]} : vector<2x128xf32> to vector<1x128xf32>
    %182 = vector.broadcast %181 : vector<1x128xf32> to vector<32x128xf32>
    %183 = arith.mulf %139, %182 : vector<32x128xf32>
    %184 = vector.extract_strided_slice %180 {offsets = [1, 0], sizes = [1, 128], strides = [1, 1]} : vector<2x128xf32> to vector<1x128xf32>
    %185 = vector.broadcast %184 : vector<1x128xf32> to vector<32x128xf32>
    %186 = arith.addf %183, %185 : vector<32x128xf32>
    %187 = arith.addf %137, %186 : vector<32x128xf32>
    %cst_61 = arith.constant 0.000000e+00 : f32
    %188 = vector.broadcast %cst_61 : f32 to vector<32x128xf32>
    %189 = arith.maximumf %187, %188 : vector<32x128xf32>
    %c0_62 = arith.constant 0 : index
    %c0_63 = arith.constant 0 : index
    %190 = vector.load %arg7[%c0_62, %c0_63] : memref<32x128xf32, #tpu.memory_space<vmem>>, vector<32x128xf32>
    tpu.vector_store %arg7[%c0_62, %c0_63], %189 {strides = array<i32>} : memref<32x128xf32, #tpu.memory_space<vmem>>, vector<32x128xf32>,
    %c0_64 = arith.constant 0 : index
    %c0_65 = arith.constant 0 : index
    %191 = vector.load %arg8[%c0_64, %c0_65] : memref<32x128xf32, #tpu.memory_space<vmem>>, vector<32x128xf32>
    tpu.vector_store %arg8[%c0_64, %c0_65], %137 {strides = array<i32>} : memref<32x128xf32, #tpu.memory_space<vmem>>, vector<32x128xf32>,
    return
  }
}

</mosaic_0001>

<llo_original>
// kernel: tpu_custom_call.1
$region0: #{tpu_custom_call.1}
  #allocation0 [shape = 'u32[]', space=smem, size = 0x4, offset = 0x4, fixed_abs, tag = 'smem constant byte address 0x4 - core index']
  #allocation1 [shape = 'u32[144,128]{1,0:T(1,128)}', space=vmem, size = 0x12000, scoped, tag = 'internal scratch']
  %s0 = inlined_call_operand.vmem [shape: f32[32,64], index: 0, kind: input, shape index: {}]
  %s1 = inlined_call_operand.hbm [shape: f32[3,64,128], index: 1, kind: input, shape index: {}]
  %s2 = inlined_call_operand.hbm [shape: f32[384,128], index: 2, kind: input, shape index: {}]
  %s3 = inlined_call_operand.vmem [shape: f32[64,128], index: 3, kind: input, shape index: {}]
  %s4 = inlined_call_operand.vmem [shape: f32[128,8], index: 4, kind: input, shape index: {}]
  %s5 = inlined_call_operand.vmem [shape: f32[8,128], index: 5, kind: input, shape index: {}]
  %s6 = inlined_call_operand.vmem [shape: f32[6,8], index: 6, kind: input, shape index: {}]
  %s7 = inlined_call_operand.hbm [shape: f32[32,128], index: 7, kind: output, shape index: {0}]
  %s8 = inlined_call_operand.hbm [shape: f32[32,128], index: 8, kind: output, shape index: {1}]
  %9 = xla_tuple %s7, %s8
  %s10 = sld [smem:[#allocation0]]
  $region54: #{tpu_custom_call.1} parent=0
    _
  %s12 = ssub.s32 1, %s10
  %s13 = scalar_select 0, %s12, %s10
  $region1: #{tpu_custom_call.1} parent=0
    #allocation2 [shape = 'u8[98304]{0}', space=vmem, size = 0x18000, scoped, tag = 'input window, operand 1, single buffered']
    #allocation3 [shape = 's32[1]{0}', space=sflag, size = 0x4, scoped, tag = 'scoped memory for tpu_custom_call.1']
    #allocation4 [shape = 's32[1]{0}', space=sflag, size = 0x4, scoped, tag = 'scoped memory for tpu_custom_call.1']
    #allocation5 [shape = 'u8[196608]{0}', space=vmem, size = 0x30000, scoped, tag = 'input window, operand 2, single buffered']
    #allocation6 [shape = 's32[1]{0}', space=sflag, size = 0x4, scoped, tag = 'scoped memory for tpu_custom_call.1']
    #allocation7 [shape = 'u8[16384]{0}', space=vmem, size = 0x4000, scoped, tag = 'output window, operand 0, single buffered']
    #allocation8 [shape = 'u8[16384]{0}', space=vmem, size = 0x4000, scoped, tag = 'output window, operand 1, single buffered']
    #allocation9 [shape = 's32[1]{0}', space=sflag, size = 0x4, scoped, tag = 'scoped memory for tpu_custom_call.1']
    %14 = vsyncpa [#allocation3], 0
    %15 = vsyncpa [#allocation6], 0
    %16 = vsyncpa [#allocation4], 0
    %17 = vsyncpa [#allocation9], 0
    // Predicated region
    $region2: #{tpu_custom_call.1} parent=1 // pred_check
      _
    $region3: #{tpu_custom_call.1} parent=1 // pred_check_branch
      %19 = sbr.rel (0) target = $region5
    $region4: #{tpu_custom_call.1} parent=1 // pred_region
      _
    $region5: #{tpu_custom_call.1} parent=1 // pred_fallthru
      _
    // Predicated region
    $region6: #{tpu_custom_call.1} parent=1 // pred_check
      _
    $region7: #{tpu_custom_call.1} parent=1 // pred_check_branch
      %21 = sbr.rel (0) target = $region9
    $region8: #{tpu_custom_call.1} parent=1 // pred_region
      %s23 = ssub.s32 3072, 3072
      %24 = vsyncadd [#allocation3], %s23
      %s25 = sshll.u32 [#allocation2], 4
      %s26 = int_to_ptr.vmem [resolvable:$true] %s25
      %31 = dma.hbm_to_vmem [thread:$0]  %s1, 3072, %s26, [#allocation3], 128, 128, 8
    $region9: #{tpu_custom_call.1} parent=1 // pred_fallthru
      _
    // Predicated region
    $region10: #{tpu_custom_call.1} parent=1 // pred_check
      _
    $region11: #{tpu_custom_call.1} parent=1 // pred_check_branch
      %33 = sbr.rel (0) target = $region13
    $region12: #{tpu_custom_call.1} parent=1 // pred_region
      %s35 = ssub.s32 6144, 6144
      %36 = vsyncadd [#allocation6], %s35
      %s37 = sshll.u32 [#allocation5], 4
      %s38 = int_to_ptr.vmem [resolvable:$true] %s37
      %43 = dma.hbm_to_vmem [thread:$0]  %s2, 6144, %s38, [#allocation6], 128, 128, 8
    $region13: #{tpu_custom_call.1} parent=1 // pred_fallthru
      _
    // Predicated region
    $region14: #{tpu_custom_call.1} parent=1 // pred_check
      _
    $region15: #{tpu_custom_call.1} parent=1 // pred_check_branch
      %45 = sbr.rel (0) target = $region17
    $region16: #{tpu_custom_call.1} parent=1 // pred_region
      _
    $region17: #{tpu_custom_call.1} parent=1 // pred_fallthru
      _
    // Predicated region
    $region18: #{tpu_custom_call.1} parent=1 // pred_check
      _
    $region19: #{tpu_custom_call.1} parent=1 // pred_check_branch
      %47 = sbr.rel (0) target = $region21
    $region20: #{tpu_custom_call.1} parent=1 // pred_region
      _
    $region21: #{tpu_custom_call.1} parent=1 // pred_fallthru
      _
    // Predicated region
    $region22: #{tpu_custom_call.1} parent=1 // pred_check
      _
    $region23: #{tpu_custom_call.1} parent=1 // pred_check_branch
      %49 = sbr.rel (0) target = $region25
    $region24: #{tpu_custom_call.1} parent=1 // pred_region
      _
    $region25: #{tpu_custom_call.1} parent=1 // pred_fallthru
      _
    // Predicated region
    $region26: #{tpu_custom_call.1} parent=1 // pred_check
      _
    $region27: #{tpu_custom_call.1} parent=1 // pred_check_branch
      %51 = sbr.rel (0) target = $region29
    $region28: #{tpu_custom_call.1} parent=1 // pred_region
      _
    $region29: #{tpu_custom_call.1} parent=1 // pred_fallthru
      _
    // Predicated region
    $region30: #{tpu_custom_call.1} parent=1 // pred_check
      _
    $region31: #{tpu_custom_call.1} parent=1 // pred_check_branch
      %53 = sbr.rel (0) target = $region33
    $region32: #{tpu_custom_call.1} parent=1 // pred_region
      %54 = dma.done [#allocation3], 3072
    $region33: #{tpu_custom_call.1} parent=1 // pred_fallthru
      _
    // Predicated region
    $region34: #{tpu_custom_call.1} parent=1 // pred_check
      _
    $region35: #{tpu_custom_call.1} parent=1 // pred_check_branch
      %56 = sbr.rel (0) target = $region37
    $region36: #{tpu_custom_call.1} parent=1 // pred_region
      %57 = dma.done [#allocation6], 6144
    $region37: #{tpu_custom_call.1} parent=1 // pred_fallthru
      _
    %v58 = vld [vmem:[%s4] sm:$0xff]
    %v59 = vld [vmem:[%s4 + $0x8] sm:$0xff]
    %v60 = vld [vmem:[%s4 + $0x10] sm:$0xff]
    %v61 = vld [vmem:[%s4 + $0x18] sm:$0xff]
    %v62 = vld [vmem:[%s4 + $0x20] sm:$0xff]
    %v63 = vld [vmem:[%s4 + $0x28] sm:$0xff]
    %v64 = vld [vmem:[%s4 + $0x30] sm:$0xff]
    %v65 = vld [vmem:[%s4 + $0x38] sm:$0xff]
    %v66 = vld [vmem:[%s4 + $0x40] sm:$0xff]
    %v67 = vld [vmem:[%s4 + $0x48] sm:$0xff]
    %v68 = vld [vmem:[%s4 + $0x50] sm:$0xff]
    %v69 = vld [vmem:[%s4 + $0x58] sm:$0xff]
    %v70 = vld [vmem:[%s4 + $0x60] sm:$0xff]
    %v71 = vld [vmem:[%s4 + $0x68] sm:$0xff]
    %v72 = vld [vmem:[%s4 + $0x70] sm:$0xff]
    %v73 = vld [vmem:[%s4 + $0x78] sm:$0xff]
    %v74 = vld [vmem:[%s5] sm:$0xff]
    %v75 = vld [vmem:[%s6] sm:$0x3f]
    %v76 = vlaneseq
    %v77 = vshrl.u32 %v76, 7
    %v78 = vadd.s32 %v77, 8
    %vm79 = vcmp.eq.s32.totalorder %v77, 0
    %vm80 = vcmp.eq.s32.totalorder %v78, 0
    %vm81 = vcmp.eq.s32.totalorder %v77, 15
    %vm82 = vcmp.eq.s32.totalorder %v78, 15
    %v83 = vld [vmem:[%s0] sm:$0xff]
    %v84 = vld [vmem:[%s0 + $0x8] sm:$0xff]
    %v85 = vld [vmem:[%s0 + $0x10] sm:$0xff]
    %v86 = vld [vmem:[%s0 + $0x18] sm:$0xff]
    %v87 = vrot.slane %v83, 7
    %v88 = vrot.slane %v84, 7
    %v89 = vrot.slane %v85, 7
    %v90 = vrot.slane %v86, 7
    %vm91 = vcmp.lt.s32.totalorder %v77, 1
    %v92 = vsel %vm91, %v89, %v90
    %v93 = vsel %vm91, %v88, %v89
    %v94 = vsel %vm91, %v87, %v88
    %v95 = vsel %vm91, %v90, %v87
    %v96 = vsel %vm79, 0.0, %v95
    %v97 = vsel %vm80, 0.0, %v94
    %v98 = vsel %vm79, 0.0, %v93
    %v99 = vsel %vm80, 0.0, %v92
    %v100 = vrot.slane %v83, 1
    %v101 = vrot.slane %v84, 1
    %v102 = vrot.slane %v85, 1
    %v103 = vrot.slane %v86, 1
    %vm104 = vcmp.lt.s32.totalorder %v77, 7
    %v105 = vsel %vm104, %v102, %v103
    %v106 = vsel %vm104, %v101, %v102
    %v107 = vsel %vm104, %v100, %v101
    %v108 = vsel %vm104, %v103, %v100
    %v109 = vsel %vm81, 0.0, %v107
    %v110 = vsel %vm82, 0.0, %v106
    %v111 = vsel %vm81, 0.0, %v105
    %v112 = vsel %vm82, 0.0, %v108
    %v113 = vld [vmem:[#allocation2] sm:$0xff]
    %v114 = vld [vmem:[#allocation2 + $0x8] sm:$0xff]
    %v115 = vld [vmem:[#allocation2 + $0x10] sm:$0xff]
    %v116 = vld [vmem:[#allocation2 + $0x18] sm:$0xff]
    %v117 = vld [vmem:[#allocation2 + $0x20] sm:$0xff]
    %v118 = vld [vmem:[#allocation2 + $0x28] sm:$0xff]
    %v119 = vld [vmem:[#allocation2 + $0x30] sm:$0xff]
    %v120 = vld [vmem:[#allocation2 + $0x38] sm:$0xff]
    %s121 = scalar_lea.vmem [#allocation2], 64
    %v122 = vld [vmem:[%s121] sm:$0xff]
    %v123 = vld [vmem:[%s121 + $0x8] sm:$0xff]
    %v124 = vld [vmem:[%s121 + $0x10] sm:$0xff]
    %v125 = vld [vmem:[%s121 + $0x18] sm:$0xff]
    %v126 = vld [vmem:[%s121 + $0x20] sm:$0xff]
    %v127 = vld [vmem:[%s121 + $0x28] sm:$0xff]
    %v128 = vld [vmem:[%s121 + $0x30] sm:$0xff]
    %v129 = vld [vmem:[%s121 + $0x38] sm:$0xff]
    %vm130 = vcmask 523264
    %v132 = vsel %vm130, %v83, 0
    %v135 = vsel %vm130, %v84, 0
    %v138 = vsel %vm130, %v85, 0
    %v141 = vsel %vm130, %v86, 0
    %143 = vmatprep.subr.mxu0 0.0
    %144 = vmatpush1.msra.mxu0 %v122
    %145 = vmatprep.subr.mxu0 0.0
    %146 = vmatpush1.msra.mxu0 %v123
    %147 = vmatprep.subr.mxu0 0.0
    %148 = vmatpush1.msra.mxu0 %v124
    %149 = vmatprep.subr.mxu0 0.0
    %150 = vmatpush1.msra.mxu0 %v125
    %151 = vmatprep.subr.mxu0 0.0
    %152 = vmatpush1.msra.mxu0 %v126
    %153 = vmatprep.subr.mxu0 0.0
    %154 = vmatpush1.msra.mxu0 %v127
    %155 = vmatprep.subr.mxu0 0.0
    %156 = vmatpush1.msra.mxu0 %v128
    %157 = vmatprep.subr.mxu0 0.0
    %158 = vmatpush1.msra.mxu0 %v129
    %159 = vmatprep.subr.mxu0 0.0
    %160 = vmatpush1.msra.mxu0 0.0
    %161 = vmatprep.subr.mxu0 0.0
    %162 = vmatpush1.msra.mxu0 0.0
    %163 = vmatprep.subr.mxu0 0.0
    %164 = vmatpush1.msra.mxu0 0.0
    %165 = vmatprep.subr.mxu0 0.0
    %166 = vmatpush1.msra.mxu0 0.0
    %167 = vmatprep.subr.mxu0 0.0
    %168 = vmatpush1.msra.mxu0 0.0
    %169 = vmatprep.subr.mxu0 0.0
    %170 = vmatpush1.msra.mxu0 0.0
    %171 = vmatprep.subr.mxu0 0.0
    %172 = vmatpush1.msra.mxu0 0.0
    %173 = vmatprep.subr.mxu0 0.0
    %174 = vmatpush1.msra.mxu0 0.0
    %175 = vmatprep.subr.mxu0 0.0
    %176 = vmatpush1.msra.mxu0 0.0
    %177 = vmatprep.subr.mxu0 0.0
    %178 = vmatpush1.msra.mxu0 0.0
    %179 = vmatprep.subr.mxu0 0.0
    %180 = vmatpush1.msra.mxu0 0.0
    %181 = vmatprep.subr.mxu0 0.0
    %182 = vmatpush1.msra.mxu0 0.0
    %183 = vmatprep.subr.mxu0 0.0
    %184 = vmatpush1.msra.mxu0 0.0
    %185 = vmatprep.subr.mxu0 0.0
    %186 = vmatpush1.msra.mxu0 0.0
    %187 = vmatprep.subr.mxu0 0.0
    %188 = vmatpush1.msra.mxu0 0.0
    %189 = vmatprep.subr.mxu0 0.0
    %190 = vmatpush1.msra.mxu0 0.0
    %191 = vmatprep.subr.mxu0 0.0
    %192 = vmatpush1.msra.mxu0 0.0
    %193 = vmatprep.subr.mxu0 0.0
    %194 = vmatpush1.msra.mxu0 0.0
    %195 = vmatprep.subr.mxu0 0.0
    %196 = vmatpush1.msra.mxu0 0.0
    %197 = vmatprep.subr.mxu0 0.0
    %198 = vmatpush1.msra.mxu0 0.0
    %199 = vmatprep.subr.mxu0 0.0
    %200 = vmatpush1.msra.mxu0 0.0
    %201 = vmatprep.subr.mxu0 0.0
    %202 = vmatpush1.msra.mxu0 0.0
    %203 = vmatprep.subr.mxu0 0.0
    %204 = vmatpush1.msra.mxu0 0.0
    %205 = vmatprep.subr.mxu0 0.0
    %206 = vmatpush1.msra.mxu0 0.0
    %207 = vmatprep.mubr.f32.mxu0 0.0
    %208 = vmatmul.mubr.f32.gmra.mrb[0].mxu0 %v132
    %v209 = vpop.f32.mrb[0].mxu0
    %v210 = vadd.f32 0.0, %v209
    %v211 = vpop.f32.mrb[0].mxu0
    %212 = vmatprep.mubr.f32.mxu0 0.0
    %213 = vmatmul.mubr.f32.gmra.mrb[0].mxu0 %v135
    %v214 = vpop.f32.mrb[0].mxu0
    %v215 = vadd.f32 0.0, %v214
    %v216 = vpop.f32.mrb[0].mxu0
    %217 = vmatprep.mubr.f32.mxu0 0.0
    %218 = vmatmul.mubr.f32.gmra.mrb[0].mxu0 %v138
    %v219 = vpop.f32.mrb[0].mxu0
    %v220 = vadd.f32 0.0, %v219
    %v221 = vpop.f32.mrb[0].mxu0
    %222 = vmatprep.mubr.f32.mxu0 0.0
    %223 = vmatmul.mubr.f32.gmra.mrb[0].mxu0 %v141
    %v224 = vpop.f32.mrb[0].mxu0
    %v225 = vadd.f32 0.0, %v224
    %v226 = vpop.f32.mrb[0].mxu0
    %227 = vdwg.mxu0
    %v229 = vsel %vm130, %v96, 0
    %v232 = vsel %vm130, %v97, 0
    %v235 = vsel %vm130, %v98, 0
    %v238 = vsel %vm130, %v99, 0
    %240 = vmatprep.subr.mxu0 0.0
    %241 = vmatpush1.msra.mxu0 %v113
    %242 = vmatprep.subr.mxu0 0.0
    %243 = vmatpush1.msra.mxu0 %v114
    %244 = vmatprep.subr.mxu0 0.0
    %245 = vmatpush1.msra.mxu0 %v115
    %246 = vmatprep.subr.mxu0 0.0
    %247 = vmatpush1.msra.mxu0 %v116
    %248 = vmatprep.subr.mxu0 0.0
    %249 = vmatpush1.msra.mxu0 %v117
    %250 = vmatprep.subr.mxu0 0.0
    %251 = vmatpush1.msra.mxu0 %v118
    %252 = vmatprep.subr.mxu0 0.0
    %253 = vmatpush1.msra.mxu0 %v119
    %254 = vmatprep.subr.mxu0 0.0
    %255 = vmatpush1.msra.mxu0 %v120
    %256 = vmatprep.subr.mxu0 0.0
    %257 = vmatpush1.msra.mxu0 0.0
    %258 = vmatprep.subr.mxu0 0.0
    %259 = vmatpush1.msra.mxu0 0.0
    %260 = vmatprep.subr.mxu0 0.0
    %261 = vmatpush1.msra.mxu0 0.0
    %262 = vmatprep.subr.mxu0 0.0
    %263 = vmatpush1.msra.mxu0 0.0
    %264 = vmatprep.subr.mxu0 0.0
    %265 = vmatpush1.msra.mxu0 0.0
    %266 = vmatprep.subr.mxu0 0.0
    %267 = vmatpush1.msra.mxu0 0.0
    %268 = vmatprep.subr.mxu0 0.0
    %269 = vmatpush1.msra.mxu0 0.0
    %270 = vmatprep.subr.mxu0 0.0
    %271 = vmatpush1.msra.mxu0 0.0
    %272 = vmatprep.subr.mxu0 0.0
    %273 = vmatpush1.msra.mxu0 0.0
    %274 = vmatprep.subr.mxu0 0.0
    %275 = vmatpush1.msra.mxu0 0.0
    %276 = vmatprep.subr.mxu0 0.0
    %277 = vmatpush1.msra.mxu0 0.0
    %278 = vmatprep.subr.mxu0 0.0
    %279 = vmatpush1.msra.mxu0 0.0
    %280 = vmatprep.subr.mxu0 0.0
    %281 = vmatpush1.msra.mxu0 0.0
    %282 = vmatprep.subr.mxu0 0.0
    %283 = vmatpush1.msra.mxu0 0.0
    %284 = vmatprep.subr.mxu0 0.0
    %285 = vmatpush1.msra.mxu0 0.0
    %286 = vmatprep.subr.mxu0 0.0
    %287 = vmatpush1.msra.mxu0 0.0
    %288 = vmatprep.subr.mxu0 0.0
    %289 = vmatpush1.msra.mxu0 0.0
    %290 = vmatprep.subr.mxu0 0.0
    %291 = vmatpush1.msra.mxu0 0.0
    %292 = vmatprep.subr.mxu0 0.0
    %293 = vmatpush1.msra.mxu0 0.0
    %294 = vmatprep.subr.mxu0 0.0
    %295 = vmatpush1.msra.mxu0 0.0
    %296 = vmatprep.subr.mxu0 0.0
    %297 = vmatpush1.msra.mxu0 0.0
    %298 = vmatprep.subr.mxu0 0.0
    %299 = vmatpush1.msra.mxu0 0.0
    %300 = vmatprep.subr.mxu0 0.0
    %301 = vmatpush1.msra.mxu0 0.0
    %302 = vmatprep.subr.mxu0 0.0
    %303 = vmatpush1.msra.mxu0 0.0
    %304 = vmatprep.mubr.f32.mxu0 0.0
    %305 = vmatmul.mubr.f32.gmra.mrb[0].mxu0 %v229
    %v306 = vpop.f32.mrb[0].mxu0
    %v307 = vadd.f32 %v210, %v306
    %v308 = vpop.f32.mrb[0].mxu0
    %309 = vmatprep.mubr.f32.mxu0 0.0
    %310 = vmatmul.mubr.f32.gmra.mrb[0].mxu0 %v232
    %v311 = vpop.f32.mrb[0].mxu0
    %v312 = vadd.f32 %v215, %v311
    %v313 = vpop.f32.mrb[0].mxu0
    %314 = vmatprep.mubr.f32.mxu0 0.0
    %315 = vmatmul.mubr.f32.gmra.mrb[0].mxu0 %v235
    %v316 = vpop.f32.mrb[0].mxu0
    %v317 = vadd.f32 %v220, %v316
    %v318 = vpop.f32.mrb[0].mxu0
    %319 = vmatprep.mubr.f32.mxu0 0.0
    %320 = vmatmul.mubr.f32.gmra.mrb[0].mxu0 %v238
    %v321 = vpop.f32.mrb[0].mxu0
    %v322 = vadd.f32 %v225, %v321
    %v323 = vpop.f32.mrb[0].mxu0
    %324 = vdwg.mxu0
    %s325 = scalar_lea.vmem [#allocation2], 128
    %v326 = vld [vmem:[%s325] sm:$0xff]
    %v327 = vld [vmem:[%s325 + $0x8] sm:$0xff]
    %v328 = vld [vmem:[%s325 + $0x10] sm:$0xff]
    %v329 = vld [vmem:[%s325 + $0x18] sm:$0xff]
    %v330 = vld [vmem:[%s325 + $0x20] sm:$0xff]
    %v331 = vld [vmem:[%s325 + $0x28] sm:$0xff]
    %v332 = vld [vmem:[%s325 + $0x30] sm:$0xff]
    %v333 = vld [vmem:[%s325 + $0x38] sm:$0xff]
    %v335 = vsel %vm130, %v109, 0
    %v338 = vsel %vm130, %v110, 0
    %v341 = vsel %vm130, %v111, 0
    %v344 = vsel %vm130, %v112, 0
    %346 = vmatprep.subr.mxu0 0.0
    %347 = vmatpush1.msra.mxu0 %v326
    %348 = vmatprep.subr.mxu0 0.0
    %349 = vmatpush1.msra.mxu0 %v327
    %350 = vmatprep.subr.mxu0 0.0
    %351 = vmatpush1.msra.mxu0 %v328
    %352 = vmatprep.subr.mxu0 0.0
    %353 = vmatpush1.msra.mxu0 %v329
    %354 = vmatprep.subr.mxu0 0.0
    %355 = vmatpush1.msra.mxu0 %v330
    %356 = vmatprep.subr.mxu0 0.0
    %357 = vmatpush1.msra.mxu0 %v331
    %358 = vmatprep.subr.mxu0 0.0
    %359 = vmatpush1.msra.mxu0 %v332
    %360 = vmatprep.subr.mxu0 0.0
    %361 = vmatpush1.msra.mxu0 %v333
    %362 = vmatprep.subr.mxu0 0.0
    %363 = vmatpush1.msra.mxu0 0.0
    %364 = vmatprep.subr.mxu0 0.0
    %365 = vmatpush1.msra.mxu0 0.0
    %366 = vmatprep.subr.mxu0 0.0
    %367 = vmatpush1.msra.mxu0 0.0
    %368 = vmatprep.subr.mxu0 0.0
    %369 = vmatpush1.msra.mxu0 0.0
    %370 = vmatprep.subr.mxu0 0.0
    %371 = vmatpush1.msra.mxu0 0.0
    %372 = vmatprep.subr.mxu0 0.0
    %373 = vmatpush1.msra.mxu0 0.0
    %374 = vmatprep.subr.mxu0 0.0
    %375 = vmatpush1.msra.mxu0 0.0
    %376 = vmatprep.subr.mxu0 0.0
    %377 = vmatpush1.msra.mxu0 0.0
    %378 = vmatprep.subr.mxu0 0.0
    %379 = vmatpush1.msra.mxu0 0.0
    %380 = vmatprep.subr.mxu0 0.0
    %381 = vmatpush1.msra.mxu0 0.0
    %382 = vmatprep.subr.mxu0 0.0
    %383 = vmatpush1.msra.mxu0 0.0
    %384 = vmatprep.subr.mxu0 0.0
    %385 = vmatpush1.msra.mxu0 0.0
    %386 = vmatprep.subr.mxu0 0.0
    %387 = vmatpush1.msra.mxu0 0.0
    %388 = vmatprep.subr.mxu0 0.0
    %389 = vmatpush1.msra.mxu0 0.0
    %390 = vmatprep.subr.mxu0 0.0
    %391 = vmatpush1.msra.mxu0 0.0
    %392 = vmatprep.subr.mxu0 0.0
    %393 = vmatpush1.msra.mxu0 0.0
    %394 = vmatprep.subr.mxu0 0.0
    %395 = vmatpush1.msra.mxu0 0.0
    %396 = vmatprep.subr.mxu0 0.0
    %397 = vmatpush1.msra.mxu0 0.0
    %398 = vmatprep.subr.mxu0 0.0
    %399 = vmatpush1.msra.mxu0 0.0
    %400 = vmatprep.subr.mxu0 0.0
    %401 = vmatpush1.msra.mxu0 0.0
    %402 = vmatprep.subr.mxu0 0.0
    %403 = vmatpush1.msra.mxu0 0.0
    %404 = vmatprep.subr.mxu0 0.0
    %405 = vmatpush1.msra.mxu0 0.0
    %406 = vmatprep.subr.mxu0 0.0
    %407 = vmatpush1.msra.mxu0 0.0
    %408 = vmatprep.subr.mxu0 0.0
    %409 = vmatpush1.msra.mxu0 0.0
    %410 = vmatprep.mubr.f32.mxu0 0.0
    %411 = vmatmul.mubr.f32.gmra.mrb[0].mxu0 %v335
    %v412 = vpop.f32.mrb[0].mxu0
    %v413 = vadd.f32 0.0, %v412
    %v414 = vpop.f32.mrb[0].mxu0
    %415 = vmatprep.mubr.f32.mxu0 0.0
    %416 = vmatmul.mubr.f32.gmra.mrb[0].mxu0 %v338
    %v417 = vpop.f32.mrb[0].mxu0
    %v418 = vadd.f32 0.0, %v417
    %v419 = vpop.f32.mrb[0].mxu0
    %420 = vmatprep.mubr.f32.mxu0 0.0
    %421 = vmatmul.mubr.f32.gmra.mrb[0].mxu0 %v341
    %v422 = vpop.f32.mrb[0].mxu0
    %v423 = vadd.f32 0.0, %v422
    %v424 = vpop.f32.mrb[0].mxu0
    %425 = vmatprep.mubr.f32.mxu0 0.0
    %426 = vmatmul.mubr.f32.gmra.mrb[0].mxu0 %v344
    %v427 = vpop.f32.mrb[0].mxu0
    %v428 = vadd.f32 0.0, %v427
    %v429 = vpop.f32.mrb[0].mxu0
    %430 = vdwg.mxu0
    %v431 = vadd.f32 %v307, %v413
    %v432 = vadd.f32 %v312, %v418
    %v433 = vadd.f32 %v317, %v423
    %v434 = vadd.f32 %v322, %v428
    %v435 = vadd.f32 %v431, %v432
    %v436 = vadd.f32 %v435, %v433
    %v437 = vadd.f32 %v436, %v434
    %v438 = vrot.slane %v437, 4
    %v439 = vadd.f32 %v437, %v438
    %v440 = vrot.slane %v439, 2
    %v441 = vadd.f32 %v439, %v440
    %v442 = vrot.slane %v441, 1
    %v443 = vadd.f32 %v441, %v442
    %v444 = vmul.f32 %v431, %v431
    %v445 = vmul.f32 %v432, %v432
    %v446 = vmul.f32 %v433, %v433
    %v447 = vmul.f32 %v434, %v434
    %v448 = vadd.f32 %v444, %v445
    %v449 = vadd.f32 %v448, %v446
    %v450 = vadd.f32 %v449, %v447
    %v451 = vrot.slane %v450, 4
    %v452 = vadd.f32 %v450, %v451
    %v453 = vrot.slane %v452, 2
    %v454 = vadd.f32 %v452, %v453
    %v455 = vrot.slane %v454, 1
    %v456 = vadd.f32 %v454, %v455
    %v457 = vsel %vm79, %v443, %v456
    %458 = vmatprep.subr.mxu0 0.0
    %459 = vmatpush1.msra.mxu0 %v58
    %460 = vmatprep.subr.mxu0 0.0
    %461 = vmatpush1.msra.mxu0 %v59
    %462 = vmatprep.subr.mxu0 0.0
    %463 = vmatpush1.msra.mxu0 %v60
    %464 = vmatprep.subr.mxu0 0.0
    %465 = vmatpush1.msra.mxu0 %v61
    %466 = vmatprep.subr.mxu0 0.0
    %467 = vmatpush1.msra.mxu0 %v62
    %468 = vmatprep.subr.mxu0 0.0
    %469 = vmatpush1.msra.mxu0 %v63
    %470 = vmatprep.subr.mxu0 0.0
    %471 = vmatpush1.msra.mxu0 %v64
    %472 = vmatprep.subr.mxu0 0.0
    %473 = vmatpush1.msra.mxu0 %v65
    %474 = vmatprep.subr.mxu0 0.0
    %475 = vmatpush1.msra.mxu0 %v66
    %476 = vmatprep.subr.mxu0 0.0
    %477 = vmatpush1.msra.mxu0 %v67
    %478 = vmatprep.subr.mxu0 0.0
    %479 = vmatpush1.msra.mxu0 %v68
    %480 = vmatprep.subr.mxu0 0.0
    %481 = vmatpush1.msra.mxu0 %v69
    %482 = vmatprep.subr.mxu0 0.0
    %483 = vmatpush1.msra.mxu0 %v70
    %484 = vmatprep.subr.mxu0 0.0
    %485 = vmatpush1.msra.mxu0 %v71
    %486 = vmatprep.subr.mxu0 0.0
    %487 = vmatpush1.msra.mxu0 %v72
    %488 = vmatprep.subr.mxu0 0.0
    %489 = vmatpush1.msra.mxu0 %v73
    %490 = vmatprep.subr.mxu0 0.0
    %491 = vmatpush1.msra.mxu0 0.0
    %492 = vmatprep.subr.mxu0 0.0
    %493 = vmatpush1.msra.mxu0 0.0
    %494 = vmatprep.subr.mxu0 0.0
    %495 = vmatpush1.msra.mxu0 0.0
    %496 = vmatprep.subr.mxu0 0.0
    %497 = vmatpush1.msra.mxu0 0.0
    %498 = vmatprep.subr.mxu0 0.0
    %499 = vmatpush1.msra.mxu0 0.0
    %500 = vmatprep.subr.mxu0 0.0
    %501 = vmatpush1.msra.mxu0 0.0
    %502 = vmatprep.subr.mxu0 0.0
    %503 = vmatpush1.msra.mxu0 0.0
    %504 = vmatprep.subr.mxu0 0.0
    %505 = vmatpush1.msra.mxu0 0.0
    %506 = vmatprep.subr.mxu0 0.0
    %507 = vmatpush1.msra.mxu0 0.0
    %508 = vmatprep.subr.mxu0 0.0
    %509 = vmatpush1.msra.mxu0 0.0
    %510 = vmatprep.subr.mxu0 0.0
    %511 = vmatpush1.msra.mxu0 0.0
    %512 = vmatprep.subr.mxu0 0.0
    %513 = vmatpush1.msra.mxu0 0.0
    %514 = vmatprep.subr.mxu0 0.0
    %515 = vmatpush1.msra.mxu0 0.0
    %516 = vmatprep.subr.mxu0 0.0
    %517 = vmatpush1.msra.mxu0 0.0
    %518 = vmatprep.subr.mxu0 0.0
    %519 = vmatpush1.msra.mxu0 0.0
    %520 = vmatprep.subr.mxu0 0.0
    %521 = vmatpush1.msra.mxu0 0.0
    %522 = vmatprep.mubr.f32.mxu0 0.0
    %523 = vmatmul.mubr.f32.gmra.mrb[0].mxu0 %v457
    %v524 = vpop.f32.mrb[0].mxu0
    %v525 = vadd.f32 0.0, %v524
    %v526 = vpop.f32.mrb[0].mxu0
    %527 = vdwg.mxu0
    %v528 = vmul.f32 %v525, 0.001953125
    %v529 = vmul.f32 %v528, %v528
    %v531 = vrot.slane %v529, 7
    %v533 = vsub.f32 %v528, %v531
    %v534 = vmax.f32 %v533, 0.0
    %v535 = vadd.f32 %v534, 1e-05
    %v536 = vrsqrt.pop %v535
    %v538 = vrot.slane %v536, 1
    %v540 = vmul.f32 %v75, %v538
    %v541 = vmul.f32 %v528, %v540
    %v543 = vrot.slane %v541, 7
    %v545 = vsub.f32 %v75, %v543
    %v546 = vlaneseq
    %v547 = vshrl.u32 %v546, 7
    %v548 = vsub.s32 0, %v547
    %v549 = vrot.slane %v540, %v548
    %v550 = vlaneseq
    %v551 = vshrl.u32 %v550, 7
    %v552 = vsub.s32 1, %v551
    %v553 = vrot.slane %v545, %v552
    %v554 = vsel %vm79, %v549, %v553
    %vm555 = vcmask 64512
    %v557 = vsel %vm555, %v554, 0
    %559 = vmatprep.subr.mxu0 0.0
    %560 = vmatpush1.msra.mxu0 %v74
    %561 = vmatprep.subr.mxu0 0.0
    %562 = vmatpush1.msra.mxu0 0.0
    %563 = vmatprep.subr.mxu0 0.0
    %564 = vmatpush1.msra.mxu0 0.0
    %565 = vmatprep.subr.mxu0 0.0
    %566 = vmatpush1.msra.mxu0 0.0
    %567 = vmatprep.subr.mxu0 0.0
    %568 = vmatpush1.msra.mxu0 0.0
    %569 = vmatprep.subr.mxu0 0.0
    %570 = vmatpush1.msra.mxu0 0.0
    %571 = vmatprep.subr.mxu0 0.0
    %572 = vmatpush1.msra.mxu0 0.0
    %573 = vmatprep.subr.mxu0 0.0
    %574 = vmatpush1.msra.mxu0 0.0
    %575 = vmatprep.subr.mxu0 0.0
    %576 = vmatpush1.msra.mxu0 0.0
    %577 = vmatprep.subr.mxu0 0.0
    %578 = vmatpush1.msra.mxu0 0.0
    %579 = vmatprep.subr.mxu0 0.0
    %580 = vmatpush1.msra.mxu0 0.0
    %581 = vmatprep.subr.mxu0 0.0
    %582 = vmatpush1.msra.mxu0 0.0
    %583 = vmatprep.subr.mxu0 0.0
    %584 = vmatpush1.msra.mxu0 0.0
    %585 = vmatprep.subr.mxu0 0.0
    %586 = vmatpush1.msra.mxu0 0.0
    %587 = vmatprep.subr.mxu0 0.0
    %588 = vmatpush1.msra.mxu0 0.0
    %589 = vmatprep.subr.mxu0 0.0
    %590 = vmatpush1.msra.mxu0 0.0
    %591 = vmatprep.subr.mxu0 0.0
    %592 = vmatpush1.msra.mxu0 0.0
    %593 = vmatprep.subr.mxu0 0.0
    %594 = vmatpush1.msra.mxu0 0.0
    %595 = vmatprep.subr.mxu0 0.0
    %596 = vmatpush1.msra.mxu0 0.0
    %597 = vmatprep.subr.mxu0 0.0
    %598 = vmatpush1.msra.mxu0 0.0
    %599 = vmatprep.subr.mxu0 0.0
    %600 = vmatpush1.msra.mxu0 0.0
    %601 = vmatprep.subr.mxu0 0.0
    %602 = vmatpush1.msra.mxu0 0.0
    %603 = vmatprep.subr.mxu0 0.0
    %604 = vmatpush1.msra.mxu0 0.0
    %605 = vmatprep.subr.mxu0 0.0
    %606 = vmatpush1.msra.mxu0 0.0
    %607 = vmatprep.subr.mxu0 0.0
    %608 = vmatpush1.msra.mxu0 0.0
    %609 = vmatprep.subr.mxu0 0.0
    %610 = vmatpush1.msra.mxu0 0.0
    %611 = vmatprep.subr.mxu0 0.0
    %612 = vmatpush1.msra.mxu0 0.0
    %613 = vmatprep.subr.mxu0 0.0
    %614 = vmatpush1.msra.mxu0 0.0
    %615 = vmatprep.subr.mxu0 0.0
    %616 = vmatpush1.msra.mxu0 0.0
    %617 = vmatprep.subr.mxu0 0.0
    %618 = vmatpush1.msra.mxu0 0.0
    %619 = vmatprep.subr.mxu0 0.0
    %620 = vmatpush1.msra.mxu0 0.0
    %621 = vmatprep.subr.mxu0 0.0
    %622 = vmatpush1.msra.mxu0 0.0
    %623 = vmatprep.mubr.f32.mxu0 0.0
    %624 = vmatmul.mubr.f32.gmra.mrb[0].mxu0 %v557
    %v625 = vpop.f32.mrb[0].mxu0
    %v626 = vadd.f32 0.0, %v625
    %v627 = vpop.f32.mrb[0].mxu0
    %628 = vdwg.mxu0
    %v629 = vlaneseq
    %v630 = vshrl.u32 %v629, 7
    %v631 = vsub.s32 0, %v630
    %v632 = vrot.slane %v626, %v631
    %v633 = vmul.f32 %v431, %v632
    %v634 = vmul.f32 %v432, %v632
    %v635 = vmul.f32 %v433, %v632
    %v636 = vmul.f32 %v434, %v632
    %v637 = vlaneseq
    %v638 = vshrl.u32 %v637, 7
    %v639 = vsub.s32 1, %v638
    %v640 = vrot.slane %v626, %v639
    %v641 = vadd.f32 %v633, %v640
    %v642 = vadd.f32 %v634, %v640
    %v643 = vadd.f32 %v635, %v640
    %v644 = vadd.f32 %v636, %v640
    %v645 = vmax.f32 %v641, 0.0
    %v646 = vmax.f32 %v642, 0.0
    %v647 = vmax.f32 %v643, 0.0
    %v648 = vmax.f32 %v644, 0.0
    %v649 = vrot.slane %v645, 7
    %v650 = vrot.slane %v646, 7
    %v651 = vrot.slane %v647, 7
    %v652 = vrot.slane %v648, 7
    %v653 = vsel %vm91, %v651, %v652
    %v654 = vsel %vm91, %v650, %v651
    %v655 = vsel %vm91, %v649, %v650
    %v656 = vsel %vm91, %v652, %v649
    %v657 = vsel %vm79, 0.0, %v656
    %v658 = vsel %vm80, 0.0, %v655
    %v659 = vsel %vm79, 0.0, %v654
    %v660 = vsel %vm80, 0.0, %v653
    %v661 = vrot.slane %v645, 1
    %v662 = vrot.slane %v646, 1
    %v663 = vrot.slane %v647, 1
    %v664 = vrot.slane %v648, 1
    %v665 = vsel %vm104, %v663, %v664
    %v666 = vsel %vm104, %v662, %v663
    %v667 = vsel %vm104, %v661, %v662
    %v668 = vsel %vm104, %v664, %v661
    %v669 = vsel %vm81, 0.0, %v667
    %v670 = vsel %vm82, 0.0, %v666
    %v671 = vsel %vm81, 0.0, %v665
    %v672 = vsel %vm82, 0.0, %v668
    %v673 = vld [vmem:[#allocation5] sm:$0xff]
    %v674 = vld [vmem:[#allocation5 + $0x8] sm:$0xff]
    %v675 = vld [vmem:[#allocation5 + $0x10] sm:$0xff]
    %v676 = vld [vmem:[#allocation5 + $0x18] sm:$0xff]
    %v677 = vld [vmem:[#allocation5 + $0x20] sm:$0xff]
    %v678 = vld [vmem:[#allocation5 + $0x28] sm:$0xff]
    %v679 = vld [vmem:[#allocation5 + $0x30] sm:$0xff]
    %v680 = vld [vmem:[#allocation5 + $0x38] sm:$0xff]
    %v681 = vld [vmem:[#allocation5 + $0x40] sm:$0xff]
    %v682 = vld [vmem:[#allocation5 + $0x48] sm:$0xff]
    %v683 = vld [vmem:[#allocation5 + $0x50] sm:$0xff]
    %v684 = vld [vmem:[#allocation5 + $0x58] sm:$0xff]
    %v685 = vld [vmem:[#allocation5 + $0x60] sm:$0xff]
    %v686 = vld [vmem:[#allocation5 + $0x68] sm:$0xff]
    %v687 = vld [vmem:[#allocation5 + $0x70] sm:$0xff]
    %v688 = vld [vmem:[#allocation5 + $0x78] sm:$0xff]
    %v689 = vld [vmem:[#allocation5 + $0x80] sm:$0xff]
    %v690 = vld [vmem:[#allocation5 + $0x88] sm:$0xff]
    %v691 = vld [vmem:[#allocation5 + $0x90] sm:$0xff]
    %v692 = vld [vmem:[#allocation5 + $0x98] sm:$0xff]
    %v693 = vld [vmem:[#allocation5 + $0xa0] sm:$0xff]
    %v694 = vld [vmem:[#allocation5 + $0xa8] sm:$0xff]
    %v695 = vld [vmem:[#allocation5 + $0xb0] sm:$0xff]
    %v696 = vld [vmem:[#allocation5 + $0xb8] sm:$0xff]
    %v697 = vld [vmem:[#allocation5 + $0xc0] sm:$0xff]
    %v698 = vld [vmem:[#allocation5 + $0xc8] sm:$0xff]
    %v699 = vld [vmem:[#allocation5 + $0xd0] sm:$0xff]
    %v700 = vld [vmem:[#allocation5 + $0xd8] sm:$0xff]
    %v701 = vld [vmem:[#allocation5 + $0xe0] sm:$0xff]
    %v702 = vld [vmem:[#allocation5 + $0xe8] sm:$0xff]
    %v703 = vld [vmem:[#allocation5 + $0xf0] sm:$0xff]
    %v704 = vld [vmem:[#allocation5 + $0xf8] sm:$0xff]
    %v705 = vld [vmem:[#allocation5 + $0x100] sm:$0xff]
    %v706 = vld [vmem:[#allocation5 + $0x108] sm:$0xff]
    %v707 = vld [vmem:[#allocation5 + $0x110] sm:$0xff]
    %v708 = vld [vmem:[#allocation5 + $0x118] sm:$0xff]
    %v709 = vld [vmem:[#allocation5 + $0x120] sm:$0xff]
    %v710 = vld [vmem:[#allocation5 + $0x128] sm:$0xff]
    %v711 = vld [vmem:[#allocation5 + $0x130] sm:$0xff]
    %v712 = vld [vmem:[#allocation5 + $0x138] sm:$0xff]
    %v713 = vld [vmem:[#allocation5 + $0x140] sm:$0xff]
    %v714 = vld [vmem:[#allocation5 + $0x148] sm:$0xff]
    %v715 = vld [vmem:[#allocation5 + $0x150] sm:$0xff]
    %v716 = vld [vmem:[#allocation5 + $0x158] sm:$0xff]
    %v717 = vld [vmem:[#allocation5 + $0x160] sm:$0xff]
    %v718 = vld [vmem:[#allocation5 + $0x168] sm:$0xff]
    %v719 = vld [vmem:[#allocation5 + $0x170] sm:$0xff]
    %v720 = vld [vmem:[#allocation5 + $0x178] sm:$0xff]
    %721 = vmatprep.subr.mxu0 0.0
    %722 = vmatpush1.msra.mxu0 %v673
    %723 = vmatprep.subr.mxu0 0.0
    %724 = vmatpush1.msra.mxu0 %v674
    %725 = vmatprep.subr.mxu0 0.0
    %726 = vmatpush1.msra.mxu0 %v675
    %727 = vmatprep.subr.mxu0 0.0
    %728 = vmatpush1.msra.mxu0 %v676
    %729 = vmatprep.subr.mxu0 0.0
    %730 = vmatpush1.msra.mxu0 %v677
    %731 = vmatprep.subr.mxu0 0.0
    %732 = vmatpush1.msra.mxu0 %v678
    %733 = vmatprep.subr.mxu0 0.0
    %734 = vmatpush1.msra.mxu0 %v679
    %735 = vmatprep.subr.mxu0 0.0
    %736 = vmatpush1.msra.mxu0 %v680
    %737 = vmatprep.subr.mxu0 0.0
    %738 = vmatpush1.msra.mxu0 %v681
    %739 = vmatprep.subr.mxu0 0.0
    %740 = vmatpush1.msra.mxu0 %v682
    %741 = vmatprep.subr.mxu0 0.0
    %742 = vmatpush1.msra.mxu0 %v683
    %743 = vmatprep.subr.mxu0 0.0
    %744 = vmatpush1.msra.mxu0 %v684
    %745 = vmatprep.subr.mxu0 0.0
    %746 = vmatpush1.msra.mxu0 %v685
    %747 = vmatprep.subr.mxu0 0.0
    %748 = vmatpush1.msra.mxu0 %v686
    %749 = vmatprep.subr.mxu0 0.0
    %750 = vmatpush1.msra.mxu0 %v687
    %751 = vmatprep.subr.mxu0 0.0
    %752 = vmatpush1.msra.mxu0 %v688
    %753 = vmatprep.subr.mxu0 0.0
    %754 = vmatpush1.msra.mxu0 %v689
    %755 = vmatprep.subr.mxu0 0.0
    %756 = vmatpush1.msra.mxu0 %v690
    %757 = vmatprep.subr.mxu0 0.0
    %758 = vmatpush1.msra.mxu0 %v691
    %759 = vmatprep.subr.mxu0 0.0
    %760 = vmatpush1.msra.mxu0 %v692
    %761 = vmatprep.subr.mxu0 0.0
    %762 = vmatpush1.msra.mxu0 %v693
    %763 = vmatprep.subr.mxu0 0.0
    %764 = vmatpush1.msra.mxu0 %v694
    %765 = vmatprep.subr.mxu0 0.0
    %766 = vmatpush1.msra.mxu0 %v695
    %767 = vmatprep.subr.mxu0 0.0
    %768 = vmatpush1.msra.mxu0 %v696
    %769 = vmatprep.subr.mxu0 0.0
    %770 = vmatpush1.msra.mxu0 %v697
    %771 = vmatprep.subr.mxu0 0.0
    %772 = vmatpush1.msra.mxu0 %v698
    %773 = vmatprep.subr.mxu0 0.0
    %774 = vmatpush1.msra.mxu0 %v699
    %775 = vmatprep.subr.mxu0 0.0
    %776 = vmatpush1.msra.mxu0 %v700
    %777 = vmatprep.subr.mxu0 0.0
    %778 = vmatpush1.msra.mxu0 %v701
    %779 = vmatprep.subr.mxu0 0.0
    %780 = vmatpush1.msra.mxu0 %v702
    %781 = vmatprep.subr.mxu0 0.0
    %782 = vmatpush1.msra.mxu0 %v703
    %783 = vmatprep.subr.mxu0 0.0
    %784 = vmatpush1.msra.mxu0 %v704
    %785 = vmatprep.mubr.f32.mxu0 %v645
    %786 = vmatmul.mubr.f32.gmra.mrb[0].mxu0 %v657
    %v787 = vpop.f32.mrb[0].mxu0
    %v788 = vadd.f32 0.0, %v787
    %v789 = vpop.f32.mrb[0].mxu0
    %790 = vmatprep.mubr.f32.mxu0 %v646
    %791 = vmatmul.mubr.f32.gmra.mrb[0].mxu0 %v658
    %v792 = vpop.f32.mrb[0].mxu0
    %v793 = vadd.f32 0.0, %v792
    %v794 = vpop.f32.mrb[0].mxu0
    %795 = vmatprep.mubr.f32.mxu0 %v647
    %796 = vmatmul.mubr.f32.gmra.mrb[0].mxu0 %v659
    %v797 = vpop.f32.mrb[0].mxu0
    %v798 = vadd.f32 0.0, %v797
    %v799 = vpop.f32.mrb[0].mxu0
    %800 = vmatprep.mubr.f32.mxu0 %v648
    %801 = vmatmul.mubr.f32.gmra.mrb[0].mxu0 %v660
    %v802 = vpop.f32.mrb[0].mxu0
    %v803 = vadd.f32 0.0, %v802
    %v804 = vpop.f32.mrb[0].mxu0
    %805 = vdwg.mxu0
    %806 = vmatprep.subr.mxu0 0.0
    %807 = vmatpush1.msra.mxu0 %v705
    %808 = vmatprep.subr.mxu0 0.0
    %809 = vmatpush1.msra.mxu0 %v706
    %810 = vmatprep.subr.mxu0 0.0
    %811 = vmatpush1.msra.mxu0 %v707
    %812 = vmatprep.subr.mxu0 0.0
    %813 = vmatpush1.msra.mxu0 %v708
    %814 = vmatprep.subr.mxu0 0.0
    %815 = vmatpush1.msra.mxu0 %v709
    %816 = vmatprep.subr.mxu0 0.0
    %817 = vmatpush1.msra.mxu0 %v710
    %818 = vmatprep.subr.mxu0 0.0
    %819 = vmatpush1.msra.mxu0 %v711
    %820 = vmatprep.subr.mxu0 0.0
    %821 = vmatpush1.msra.mxu0 %v712
    %822 = vmatprep.subr.mxu0 0.0
    %823 = vmatpush1.msra.mxu0 %v713
    %824 = vmatprep.subr.mxu0 0.0
    %825 = vmatpush1.msra.mxu0 %v714
    %826 = vmatprep.subr.mxu0 0.0
    %827 = vmatpush1.msra.mxu0 %v715
    %828 = vmatprep.subr.mxu0 0.0
    %829 = vmatpush1.msra.mxu0 %v716
    %830 = vmatprep.subr.mxu0 0.0
    %831 = vmatpush1.msra.mxu0 %v717
    %832 = vmatprep.subr.mxu0 0.0
    %833 = vmatpush1.msra.mxu0 %v718
    %834 = vmatprep.subr.mxu0 0.0
    %835 = vmatpush1.msra.mxu0 %v719
    %836 = vmatprep.subr.mxu0 0.0
    %837 = vmatpush1.msra.mxu0 %v720
    %838 = vmatprep.subr.mxu0 0.0
    %839 = vmatpush1.msra.mxu0 0.0
    %840 = vmatprep.subr.mxu0 0.0
    %841 = vmatpush1.msra.mxu0 0.0
    %842 = vmatprep.subr.mxu0 0.0
    %843 = vmatpush1.msra.mxu0 0.0
    %844 = vmatprep.subr.mxu0 0.0
    %845 = vmatpush1.msra.mxu0 0.0
    %846 = vmatprep.subr.mxu0 0.0
    %847 = vmatpush1.msra.mxu0 0.0
    %848 = vmatprep.subr.mxu0 0.0
    %849 = vmatpush1.msra.mxu0 0.0
    %850 = vmatprep.subr.mxu0 0.0
    %851 = vmatpush1.msra.mxu0 0.0
    %852 = vmatprep.subr.mxu0 0.0
    %853 = vmatpush1.msra.mxu0 0.0
    %854 = vmatprep.subr.mxu0 0.0
    %855 = vmatpush1.msra.mxu0 0.0
    %856 = vmatprep.subr.mxu0 0.0
    %857 = vmatpush1.msra.mxu0 0.0
    %858 = vmatprep.subr.mxu0 0.0
    %859 = vmatpush1.msra.mxu0 0.0
    %860 = vmatprep.subr.mxu0 0.0
    %861 = vmatpush1.msra.mxu0 0.0
    %862 = vmatprep.subr.mxu0 0.0
    %863 = vmatpush1.msra.mxu0 0.0
    %864 = vmatprep.subr.mxu0 0.0
    %865 = vmatpush1.msra.mxu0 0.0
    %866 = vmatprep.subr.mxu0 0.0
    %867 = vmatpush1.msra.mxu0 0.0
    %868 = vmatprep.subr.mxu0 0.0
    %869 = vmatpush1.msra.mxu0 0.0
    %870 = vmatprep.mubr.f32.mxu0 0.0
    %871 = vmatmul.mubr.f32.gmra.mrb[0].mxu0 %v669
    %v872 = vpop.f32.mrb[0].mxu0
    %v873 = vadd.f32 %v788, %v872
    %v874 = vpop.f32.mrb[0].mxu0
    %875 = vmatprep.mubr.f32.mxu0 0.0
    %876 = vmatmul.mubr.f32.gmra.mrb[0].mxu0 %v670
    %v877 = vpop.f32.mrb[0].mxu0
    %v878 = vadd.f32 %v793, %v877
    %v879 = vpop.f32.mrb[0].mxu0
    %880 = vmatprep.mubr.f32.mxu0 0.0
    %881 = vmatmul.mubr.f32.gmra.mrb[0].mxu0 %v671
    %v882 = vpop.f32.mrb[0].mxu0
    %v883 = vadd.f32 %v798, %v882
    %v884 = vpop.f32.mrb[0].mxu0
    %885 = vmatprep.mubr.f32.mxu0 0.0
    %886 = vmatmul.mubr.f32.gmra.mrb[0].mxu0 %v672
    %v887 = vpop.f32.mrb[0].mxu0
    %v888 = vadd.f32 %v803, %v887
    %v889 = vpop.f32.mrb[0].mxu0
    %890 = vdwg.mxu0
    %v891 = vadd.f32 %v873, %v878
    %v892 = vadd.f32 %v891, %v883
    %v893 = vadd.f32 %v892, %v888
    %v894 = vrot.slane %v893, 4
    %v895 = vadd.f32 %v893, %v894
    %v896 = vrot.slane %v895, 2
    %v897 = vadd.f32 %v895, %v896
    %v898 = vrot.slane %v897, 1
    %v899 = vadd.f32 %v897, %v898
    %v900 = vmul.f32 %v873, %v873
    %v901 = vmul.f32 %v878, %v878
    %v902 = vmul.f32 %v883, %v883
    %v903 = vmul.f32 %v888, %v888
    %v904 = vadd.f32 %v900, %v901
    %v905 = vadd.f32 %v904, %v902
    %v906 = vadd.f32 %v905, %v903
    %v907 = vrot.slane %v906, 4
    %v908 = vadd.f32 %v906, %v907
    %v909 = vrot.slane %v908, 2
    %v910 = vadd.f32 %v908, %v909
    %v911 = vrot.slane %v910, 1
    %v912 = vadd.f32 %v910, %v911
    %v913 = vsel %vm79, %v899, %v912
    %914 = vmatprep.subr.mxu0 0.0
    %915 = vmatpush1.msra.mxu0 %v58
    %916 = vmatprep.subr.mxu0 0.0
    %917 = vmatpush1.msra.mxu0 %v59
    %918 = vmatprep.subr.mxu0 0.0
    %919 = vmatpush1.msra.mxu0 %v60
    %920 = vmatprep.subr.mxu0 0.0
    %921 = vmatpush1.msra.mxu0 %v61
    %922 = vmatprep.subr.mxu0 0.0
    %923 = vmatpush1.msra.mxu0 %v62
    %924 = vmatprep.subr.mxu0 0.0
    %925 = vmatpush1.msra.mxu0 %v63
    %926 = vmatprep.subr.mxu0 0.0
    %927 = vmatpush1.msra.mxu0 %v64
    %928 = vmatprep.subr.mxu0 0.0
    %929 = vmatpush1.msra.mxu0 %v65
    %930 = vmatprep.subr.mxu0 0.0
    %931 = vmatpush1.msra.mxu0 %v66
    %932 = vmatprep.subr.mxu0 0.0
    %933 = vmatpush1.msra.mxu0 %v67
    %934 = vmatprep.subr.mxu0 0.0
    %935 = vmatpush1.msra.mxu0 %v68
    %936 = vmatprep.subr.mxu0 0.0
    %937 = vmatpush1.msra.mxu0 %v69
    %938 = vmatprep.subr.mxu0 0.0
    %939 = vmatpush1.msra.mxu0 %v70
    %940 = vmatprep.subr.mxu0 0.0
    %941 = vmatpush1.msra.mxu0 %v71
    %942 = vmatprep.subr.mxu0 0.0
    %943 = vmatpush1.msra.mxu0 %v72
    %944 = vmatprep.subr.mxu0 0.0
    %945 = vmatpush1.msra.mxu0 %v73
    %946 = vmatprep.subr.mxu0 0.0
    %947 = vmatpush1.msra.mxu0 0.0
    %948 = vmatprep.subr.mxu0 0.0
    %949 = vmatpush1.msra.mxu0 0.0
    %950 = vmatprep.subr.mxu0 0.0
    %951 = vmatpush1.msra.mxu0 0.0
    %952 = vmatprep.subr.mxu0 0.0
    %953 = vmatpush1.msra.mxu0 0.0
    %954 = vmatprep.subr.mxu0 0.0
    %955 = vmatpush1.msra.mxu0 0.0
    %956 = vmatprep.subr.mxu0 0.0
    %957 = vmatpush1.msra.mxu0 0.0
    %958 = vmatprep.subr.mxu0 0.0
    %959 = vmatpush1.msra.mxu0 0.0
    %960 = vmatprep.subr.mxu0 0.0
    %961 = vmatpush1.msra.mxu0 0.0
    %962 = vmatprep.subr.mxu0 0.0
    %963 = vmatpush1.msra.mxu0 0.0
    %964 = vmatprep.subr.mxu0 0.0
    %965 = vmatpush1.msra.mxu0 0.0
    %966 = vmatprep.subr.mxu0 0.0
    %967 = vmatpush1.msra.mxu0 0.0
    %968 = vmatprep.subr.mxu0 0.0
    %969 = vmatpush1.msra.mxu0 0.0
    %970 = vmatprep.subr.mxu0 0.0
    %971 = vmatpush1.msra.mxu0 0.0
    %972 = vmatprep.subr.mxu0 0.0
    %973 = vmatpush1.msra.mxu0 0.0
    %974 = vmatprep.subr.mxu0 0.0
    %975 = vmatpush1.msra.mxu0 0.0
    %976 = vmatprep.subr.mxu0 0.0
    %977 = vmatpush1.msra.mxu0 0.0
    %978 = vmatprep.mubr.f32.mxu0 0.0
    %979 = vmatmul.mubr.f32.gmra.mrb[0].mxu0 %v913
    %v980 = vpop.f32.mrb[0].mxu0
    %v981 = vadd.f32 0.0, %v980
    %v982 = vpop.f32.mrb[0].mxu0
    %983 = vdwg.mxu0
    %v984 = vmul.f32 %v981, 0.001953125
    %v985 = vmul.f32 %v984, %v984
    %v987 = vrot.slane %v985, 7
    %v989 = vsub.f32 %v984, %v987
    %v990 = vmax.f32 %v989, 0.0
    %v991 = vadd.f32 %v990, 1e-05
    %v992 = vrsqrt.pop %v991
    %v994 = vrot.slane %v992, 7
    %v996 = vmul.f32 %v75, %v994
    %v998 = vrot.slane %v996, 2
    %v1000 = vmul.f32 %v984, %v998
    %v1002 = vrot.slane %v1000, 5
    %v1004 = vsub.f32 %v75, %v1002
    %v1005 = vlaneseq
    %v1006 = vshrl.u32 %v1005, 7
    %v1007 = vsub.s32 2, %v1006
    %v1008 = vrot.slane %v996, %v1007
    %v1009 = vlaneseq
    %v1010 = vshrl.u32 %v1009, 7
    %v1011 = vsub.s32 3, %v1010
    %v1012 = vrot.slane %v1004, %v1011
    %v1013 = vsel %vm79, %v1008, %v1012
    %v1015 = vsel %vm555, %v1013, 0
    %1017 = vmatprep.subr.mxu0 0.0
    %1018 = vmatpush1.msra.mxu0 %v74
    %1019 = vmatprep.subr.mxu0 0.0
    %1020 = vmatpush1.msra.mxu0 0.0
    %1021 = vmatprep.subr.mxu0 0.0
    %1022 = vmatpush1.msra.mxu0 0.0
    %1023 = vmatprep.subr.mxu0 0.0
    %1024 = vmatpush1.msra.mxu0 0.0
    %1025 = vmatprep.subr.mxu0 0.0
    %1026 = vmatpush1.msra.mxu0 0.0
    %1027 = vmatprep.subr.mxu0 0.0
    %1028 = vmatpush1.msra.mxu0 0.0
    %1029 = vmatprep.subr.mxu0 0.0
    %1030 = vmatpush1.msra.mxu0 0.0
    %1031 = vmatprep.subr.mxu0 0.0
    %1032 = vmatpush1.msra.mxu0 0.0
    %1033 = vmatprep.subr.mxu0 0.0
    %1034 = vmatpush1.msra.mxu0 0.0
    %1035 = vmatprep.subr.mxu0 0.0
    %1036 = vmatpush1.msra.mxu0 0.0
    %1037 = vmatprep.subr.mxu0 0.0
    %1038 = vmatpush1.msra.mxu0 0.0
    %1039 = vmatprep.subr.mxu0 0.0
    %1040 = vmatpush1.msra.mxu0 0.0
    %1041 = vmatprep.subr.mxu0 0.0
    %1042 = vmatpush1.msra.mxu0 0.0
    %1043 = vmatprep.subr.mxu0 0.0
    %1044 = vmatpush1.msra.mxu0 0.0
    %1045 = vmatprep.subr.mxu0 0.0
    %1046 = vmatpush1.msra.mxu0 0.0
    %1047 = vmatprep.subr.mxu0 0.0
    %1048 = vmatpush1.msra.mxu0 0.0
    %1049 = vmatprep.subr.mxu0 0.0
    %1050 = vmatpush1.msra.mxu0 0.0
    %1051 = vmatprep.subr.mxu0 0.0
    %1052 = vmatpush1.msra.mxu0 0.0
    %1053 = vmatprep.subr.mxu0 0.0
    %1054 = vmatpush1.msra.mxu0 0.0
    %1055 = vmatprep.subr.mxu0 0.0
    %1056 = vmatpush1.msra.mxu0 0.0
    %1057 = vmatprep.subr.mxu0 0.0
    %1058 = vmatpush1.msra.mxu0 0.0
    %1059 = vmatprep.subr.mxu0 0.0
    %1060 = vmatpush1.msra.mxu0 0.0
    %1061 = vmatprep.subr.mxu0 0.0
    %1062 = vmatpush1.msra.mxu0 0.0
    %1063 = vmatprep.subr.mxu0 0.0
    %1064 = vmatpush1.msra.mxu0 0.0
    %1065 = vmatprep.subr.mxu0 0.0
    %1066 = vmatpush1.msra.mxu0 0.0
    %1067 = vmatprep.subr.mxu0 0.0
    %1068 = vmatpush1.msra.mxu0 0.0
    %1069 = vmatprep.subr.mxu0 0.0
    %1070 = vmatpush1.msra.mxu0 0.0
    %1071 = vmatprep.subr.mxu0 0.0
    %1072 = vmatpush1.msra.mxu0 0.0
    %1073 = vmatprep.subr.mxu0 0.0
    %1074 = vmatpush1.msra.mxu0 0.0
    %1075 = vmatprep.subr.mxu0 0.0
    %1076 = vmatpush1.msra.mxu0 0.0
    %1077 = vmatprep.subr.mxu0 0.0
    %1078 = vmatpush1.msra.mxu0 0.0
    %1079 = vmatprep.subr.mxu0 0.0
    %1080 = vmatpush1.msra.mxu0 0.0
    %1081 = vmatprep.mubr.f32.mxu0 0.0
    %1082 = vmatmul.mubr.f32.gmra.mrb[0].mxu0 %v1015
    %v1083 = vpop.f32.mrb[0].mxu0
    %v1084 = vadd.f32 0.0, %v1083
    %v1085 = vpop.f32.mrb[0].mxu0
    %1086 = vdwg.mxu0
    %v1087 = vlaneseq
    %v1088 = vshrl.u32 %v1087, 7
    %v1089 = vsub.s32 0, %v1088
    %v1090 = vrot.slane %v1084, %v1089
    %v1091 = vmul.f32 %v873, %v1090
    %v1092 = vmul.f32 %v878, %v1090
    %v1093 = vmul.f32 %v883, %v1090
    %v1094 = vmul.f32 %v888, %v1090
    %v1095 = vlaneseq
    %v1096 = vshrl.u32 %v1095, 7
    %v1097 = vsub.s32 1, %v1096
    %v1098 = vrot.slane %v1084, %v1097
    %v1099 = vadd.f32 %v1091, %v1098
    %v1100 = vadd.f32 %v1092, %v1098
    %v1101 = vadd.f32 %v1093, %v1098
    %v1102 = vadd.f32 %v1094, %v1098
    %v1103 = vld [vmem:[%s3] sm:$0xff]
    %v1104 = vld [vmem:[%s3 + $0x8] sm:$0xff]
    %v1105 = vld [vmem:[%s3 + $0x10] sm:$0xff]
    %v1106 = vld [vmem:[%s3 + $0x18] sm:$0xff]
    %v1107 = vld [vmem:[%s3 + $0x20] sm:$0xff]
    %v1108 = vld [vmem:[%s3 + $0x28] sm:$0xff]
    %v1109 = vld [vmem:[%s3 + $0x30] sm:$0xff]
    %v1110 = vld [vmem:[%s3 + $0x38] sm:$0xff]
    %1111 = vmatprep.subr.mxu0 0.0
    %1112 = vmatpush1.msra.mxu0 %v1103
    %1113 = vmatprep.subr.mxu0 0.0
    %1114 = vmatpush1.msra.mxu0 %v1104
    %1115 = vmatprep.subr.mxu0 0.0
    %1116 = vmatpush1.msra.mxu0 %v1105
    %1117 = vmatprep.subr.mxu0 0.0
    %1118 = vmatpush1.msra.mxu0 %v1106
    %1119 = vmatprep.subr.mxu0 0.0
    %1120 = vmatpush1.msra.mxu0 %v1107
    %1121 = vmatprep.subr.mxu0 0.0
    %1122 = vmatpush1.msra.mxu0 %v1108
    %1123 = vmatprep.subr.mxu0 0.0
    %1124 = vmatpush1.msra.mxu0 %v1109
    %1125 = vmatprep.subr.mxu0 0.0
    %1126 = vmatpush1.msra.mxu0 %v1110
    %1127 = vmatprep.subr.mxu0 0.0
    %1128 = vmatpush1.msra.mxu0 0.0
    %1129 = vmatprep.subr.mxu0 0.0
    %1130 = vmatpush1.msra.mxu0 0.0
    %1131 = vmatprep.subr.mxu0 0.0
    %1132 = vmatpush1.msra.mxu0 0.0
    %1133 = vmatprep.subr.mxu0 0.0
    %1134 = vmatpush1.msra.mxu0 0.0
    %1135 = vmatprep.subr.mxu0 0.0
    %1136 = vmatpush1.msra.mxu0 0.0
    %1137 = vmatprep.subr.mxu0 0.0
    %1138 = vmatpush1.msra.mxu0 0.0
    %1139 = vmatprep.subr.mxu0 0.0
    %1140 = vmatpush1.msra.mxu0 0.0
    %1141 = vmatprep.subr.mxu0 0.0
    %1142 = vmatpush1.msra.mxu0 0.0
    %1143 = vmatprep.subr.mxu0 0.0
    %1144 = vmatpush1.msra.mxu0 0.0
    %1145 = vmatprep.subr.mxu0 0.0
    %1146 = vmatpush1.msra.mxu0 0.0
    %1147 = vmatprep.subr.mxu0 0.0
    %1148 = vmatpush1.msra.mxu0 0.0
    %1149 = vmatprep.subr.mxu0 0.0
    %1150 = vmatpush1.msra.mxu0 0.0
    %1151 = vmatprep.subr.mxu0 0.0
    %1152 = vmatpush1.msra.mxu0 0.0
    %1153 = vmatprep.subr.mxu0 0.0
    %1154 = vmatpush1.msra.mxu0 0.0
    %1155 = vmatprep.subr.mxu0 0.0
    %1156 = vmatpush1.msra.mxu0 0.0
    %1157 = vmatprep.subr.mxu0 0.0
    %1158 = vmatpush1.msra.mxu0 0.0
    %1159 = vmatprep.subr.mxu0 0.0
    %1160 = vmatpush1.msra.mxu0 0.0
    %1161 = vmatprep.subr.mxu0 0.0
    %1162 = vmatpush1.msra.mxu0 0.0
    %1163 = vmatprep.subr.mxu0 0.0
    %1164 = vmatpush1.msra.mxu0 0.0
    %1165 = vmatprep.subr.mxu0 0.0
    %1166 = vmatpush1.msra.mxu0 0.0
    %1167 = vmatprep.subr.mxu0 0.0
    %1168 = vmatpush1.msra.mxu0 0.0
    %1169 = vmatprep.subr.mxu0 0.0
    %1170 = vmatpush1.msra.mxu0 0.0
    %1171 = vmatprep.subr.mxu0 0.0
    %1172 = vmatpush1.msra.mxu0 0.0
    %1173 = vmatprep.subr.mxu0 0.0
    %1174 = vmatpush1.msra.mxu0 0.0
    %1175 = vmatprep.mubr.f32.mxu0 0.0
    %1176 = vmatmul.mubr.f32.gmra.mrb[0].mxu0 %v132
    %v1177 = vpop.f32.mrb[0].mxu0
    %v1178 = vadd.f32 0.0, %v1177
    %v1179 = vpop.f32.mrb[0].mxu0
    %1180 = vmatprep.mubr.f32.mxu0 0.0
    %1181 = vmatmul.mubr.f32.gmra.mrb[0].mxu0 %v135
    %v1182 = vpop.f32.mrb[0].mxu0
    %v1183 = vadd.f32 0.0, %v1182
    %v1184 = vpop.f32.mrb[0].mxu0
    %1185 = vmatprep.mubr.f32.mxu0 0.0
    %1186 = vmatmul.mubr.f32.gmra.mrb[0].mxu0 %v138
    %v1187 = vpop.f32.mrb[0].mxu0
    %v1188 = vadd.f32 0.0, %v1187
    %v1189 = vpop.f32.mrb[0].mxu0
    %1190 = vmatprep.mubr.f32.mxu0 0.0
    %1191 = vmatmul.mubr.f32.gmra.mrb[0].mxu0 %v141
    %v1192 = vpop.f32.mrb[0].mxu0
    %v1193 = vadd.f32 0.0, %v1192
    %v1194 = vpop.f32.mrb[0].mxu0
    %1195 = vdwg.mxu0
    %v1196 = vadd.f32 %v1178, %v1183
    %v1197 = vadd.f32 %v1196, %v1188
    %v1198 = vadd.f32 %v1197, %v1193
    %v1199 = vrot.slane %v1198, 4
    %v1200 = vadd.f32 %v1198, %v1199
    %v1201 = vrot.slane %v1200, 2
    %v1202 = vadd.f32 %v1200, %v1201
    %v1203 = vrot.slane %v1202, 1
    %v1204 = vadd.f32 %v1202, %v1203
    %v1205 = vmul.f32 %v1178, %v1178
    %v1206 = vmul.f32 %v1183, %v1183
    %v1207 = vmul.f32 %v1188, %v1188
    %v1208 = vmul.f32 %v1193, %v1193
    %v1209 = vadd.f32 %v1205, %v1206
    %v1210 = vadd.f32 %v1209, %v1207
    %v1211 = vadd.f32 %v1210, %v1208
    %v1212 = vrot.slane %v1211, 4
    %v1213 = vadd.f32 %v1211, %v1212
    %v1214 = vrot.slane %v1213, 2
    %v1215 = vadd.f32 %v1213, %v1214
    %v1216 = vrot.slane %v1215, 1
    %v1217 = vadd.f32 %v1215, %v1216
    %v1218 = vsel %vm79, %v1204, %v1217
    %1219 = vmatprep.subr.mxu0 0.0
    %1220 = vmatpush1.msra.mxu0 %v58
    %1221 = vmatprep.subr.mxu0 0.0
    %1222 = vmatpush1.msra.mxu0 %v59
    %1223 = vmatprep.subr.mxu0 0.0
    %1224 = vmatpush1.msra.mxu0 %v60
    %1225 = vmatprep.subr.mxu0 0.0
    %1226 = vmatpush1.msra.mxu0 %v61
    %1227 = vmatprep.subr.mxu0 0.0
    %1228 = vmatpush1.msra.mxu0 %v62
    %1229 = vmatprep.subr.mxu0 0.0
    %1230 = vmatpush1.msra.mxu0 %v63
    %1231 = vmatprep.subr.mxu0 0.0
    %1232 = vmatpush1.msra.mxu0 %v64
    %1233 = vmatprep.subr.mxu0 0.0
    %1234 = vmatpush1.msra.mxu0 %v65
    %1235 = vmatprep.subr.mxu0 0.0
    %1236 = vmatpush1.msra.mxu0 %v66
    %1237 = vmatprep.subr.mxu0 0.0
    %1238 = vmatpush1.msra.mxu0 %v67
    %1239 = vmatprep.subr.mxu0 0.0
    %1240 = vmatpush1.msra.mxu0 %v68
    %1241 = vmatprep.subr.mxu0 0.0
    %1242 = vmatpush1.msra.mxu0 %v69
    %1243 = vmatprep.subr.mxu0 0.0
    %1244 = vmatpush1.msra.mxu0 %v70
    %1245 = vmatprep.subr.mxu0 0.0
    %1246 = vmatpush1.msra.mxu0 %v71
    %1247 = vmatprep.subr.mxu0 0.0
    %1248 = vmatpush1.msra.mxu0 %v72
    %1249 = vmatprep.subr.mxu0 0.0
    %1250 = vmatpush1.msra.mxu0 %v73
    %1251 = vmatprep.subr.mxu0 0.0
    %1252 = vmatpush1.msra.mxu0 0.0
    %1253 = vmatprep.subr.mxu0 0.0
    %1254 = vmatpush1.msra.mxu0 0.0
    %1255 = vmatprep.subr.mxu0 0.0
    %1256 = vmatpush1.msra.mxu0 0.0
    %1257 = vmatprep.subr.mxu0 0.0
    %1258 = vmatpush1.msra.mxu0 0.0
    %1259 = vmatprep.subr.mxu0 0.0
    %1260 = vmatpush1.msra.mxu0 0.0
    %1261 = vmatprep.subr.mxu0 0.0
    %1262 = vmatpush1.msra.mxu0 0.0
    %1263 = vmatprep.subr.mxu0 0.0
    %1264 = vmatpush1.msra.mxu0 0.0
    %1265 = vmatprep.subr.mxu0 0.0
    %1266 = vmatpush1.msra.mxu0 0.0
    %1267 = vmatprep.subr.mxu0 0.0
    %1268 = vmatpush1.msra.mxu0 0.0
    %1269 = vmatprep.subr.mxu0 0.0
    %1270 = vmatpush1.msra.mxu0 0.0
    %1271 = vmatprep.subr.mxu0 0.0
    %1272 = vmatpush1.msra.mxu0 0.0
    %1273 = vmatprep.subr.mxu0 0.0
    %1274 = vmatpush1.msra.mxu0 0.0
    %1275 = vmatprep.subr.mxu0 0.0
    %1276 = vmatpush1.msra.mxu0 0.0
    %1277 = vmatprep.subr.mxu0 0.0
    %1278 = vmatpush1.msra.mxu0 0.0
    %1279 = vmatprep.subr.mxu0 0.0
    %1280 = vmatpush1.msra.mxu0 0.0
    %1281 = vmatprep.subr.mxu0 0.0
    %1282 = vmatpush1.msra.mxu0 0.0
    %1283 = vmatprep.mubr.f32.mxu0 0.0
    %1284 = vmatmul.mubr.f32.gmra.mrb[0].mxu0 %v1218
    %v1285 = vpop.f32.mrb[0].mxu0
    %v1286 = vadd.f32 0.0, %v1285
    %v1287 = vpop.f32.mrb[0].mxu0
    %1288 = vdwg.mxu0
    %v1289 = vmul.f32 %v1286, 0.001953125
    %v1290 = vmul.f32 %v1289, %v1289
    %v1292 = vrot.slane %v1290, 7
    %v1294 = vsub.f32 %v1289, %v1292
    %v1295 = vmax.f32 %v1294, 0.0
    %v1296 = vadd.f32 %v1295, 1e-05
    %v1297 = vrsqrt.pop %v1296
    %v1299 = vrot.slane %v1297, 5
    %v1301 = vmul.f32 %v75, %v1299
    %v1303 = vrot.slane %v1301, 4
    %v1305 = vmul.f32 %v1289, %v1303
    %v1307 = vrot.slane %v1305, 3
    %v1309 = vsub.f32 %v75, %v1307
    %v1310 = vlaneseq
    %v1311 = vshrl.u32 %v1310, 7
    %v1312 = vsub.s32 4, %v1311
    %v1313 = vrot.slane %v1301, %v1312
    %v1314 = vlaneseq
    %v1315 = vshrl.u32 %v1314, 7
    %v1316 = vsub.s32 5, %v1315
    %v1317 = vrot.slane %v1309, %v1316
    %v1318 = vsel %vm79, %v1313, %v1317
    %v1320 = vsel %vm555, %v1318, 0
    %1322 = vmatprep.subr.mxu0 0.0
    %1323 = vmatpush1.msra.mxu0 %v74
    %1324 = vmatprep.subr.mxu0 0.0
    %1325 = vmatpush1.msra.mxu0 0.0
    %1326 = vmatprep.subr.mxu0 0.0
    %1327 = vmatpush1.msra.mxu0 0.0
    %1328 = vmatprep.subr.mxu0 0.0
    %1329 = vmatpush1.msra.mxu0 0.0
    %1330 = vmatprep.subr.mxu0 0.0
    %1331 = vmatpush1.msra.mxu0 0.0
    %1332 = vmatprep.subr.mxu0 0.0
    %1333 = vmatpush1.msra.mxu0 0.0
    %1334 = vmatprep.subr.mxu0 0.0
    %1335 = vmatpush1.msra.mxu0 0.0
    %1336 = vmatprep.subr.mxu0 0.0
    %1337 = vmatpush1.msra.mxu0 0.0
    %1338 = vmatprep.subr.mxu0 0.0
    %1339 = vmatpush1.msra.mxu0 0.0
    %1340 = vmatprep.subr.mxu0 0.0
    %1341 = vmatpush1.msra.mxu0 0.0
    %1342 = vmatprep.subr.mxu0 0.0
    %1343 = vmatpush1.msra.mxu0 0.0
    %1344 = vmatprep.subr.mxu0 0.0
    %1345 = vmatpush1.msra.mxu0 0.0
    %1346 = vmatprep.subr.mxu0 0.0
    %1347 = vmatpush1.msra.mxu0 0.0
    %1348 = vmatprep.subr.mxu0 0.0
    %1349 = vmatpush1.msra.mxu0 0.0
    %1350 = vmatprep.subr.mxu0 0.0
    %1351 = vmatpush1.msra.mxu0 0.0
    %1352 = vmatprep.subr.mxu0 0.0
    %1353 = vmatpush1.msra.mxu0 0.0
    %1354 = vmatprep.subr.mxu0 0.0
    %1355 = vmatpush1.msra.mxu0 0.0
    %1356 = vmatprep.subr.mxu0 0.0
    %1357 = vmatpush1.msra.mxu0 0.0
    %1358 = vmatprep.subr.mxu0 0.0
    %1359 = vmatpush1.msra.mxu0 0.0
    %1360 = vmatprep.subr.mxu0 0.0
    %1361 = vmatpush1.msra.mxu0 0.0
    %1362 = vmatprep.subr.mxu0 0.0
    %1363 = vmatpush1.msra.mxu0 0.0
    %1364 = vmatprep.subr.mxu0 0.0
    %1365 = vmatpush1.msra.mxu0 0.0
    %1366 = vmatprep.subr.mxu0 0.0
    %1367 = vmatpush1.msra.mxu0 0.0
    %1368 = vmatprep.subr.mxu0 0.0
    %1369 = vmatpush1.msra.mxu0 0.0
    %1370 = vmatprep.subr.mxu0 0.0
    %1371 = vmatpush1.msra.mxu0 0.0
    %1372 = vmatprep.subr.mxu0 0.0
    %1373 = vmatpush1.msra.mxu0 0.0
    %1374 = vmatprep.subr.mxu0 0.0
    %1375 = vmatpush1.msra.mxu0 0.0
    %1376 = vmatprep.subr.mxu0 0.0
    %1377 = vmatpush1.msra.mxu0 0.0
    %1378 = vmatprep.subr.mxu0 0.0
    %1379 = vmatpush1.msra.mxu0 0.0
    %1380 = vmatprep.subr.mxu0 0.0
    %1381 = vmatpush1.msra.mxu0 0.0
    %1382 = vmatprep.subr.mxu0 0.0
    %1383 = vmatpush1.msra.mxu0 0.0
    %1384 = vmatprep.subr.mxu0 0.0
    %1385 = vmatpush1.msra.mxu0 0.0
    %1386 = vmatprep.mubr.f32.mxu0 0.0
    %1387 = vmatmul.mubr.f32.gmra.mrb[0].mxu0 %v1320
    %v1388 = vpop.f32.mrb[0].mxu0
    %v1389 = vadd.f32 0.0, %v1388
    %v1390 = vpop.f32.mrb[0].mxu0
    %1391 = vdwg.mxu0
    %v1392 = vlaneseq
    %v1393 = vshrl.u32 %v1392, 7
    %v1394 = vsub.s32 0, %v1393
    %v1395 = vrot.slane %v1389, %v1394
    %v1396 = vmul.f32 %v1178, %v1395
    %v1397 = vmul.f32 %v1183, %v1395
    %v1398 = vmul.f32 %v1188, %v1395
    %v1399 = vmul.f32 %v1193, %v1395
    %v1400 = vlaneseq
    %v1401 = vshrl.u32 %v1400, 7
    %v1402 = vsub.s32 1, %v1401
    %v1403 = vrot.slane %v1389, %v1402
    %v1404 = vadd.f32 %v1396, %v1403
    %v1405 = vadd.f32 %v1397, %v1403
    %v1406 = vadd.f32 %v1398, %v1403
    %v1407 = vadd.f32 %v1399, %v1403
    %v1408 = vadd.f32 %v1099, %v1404
    %v1409 = vadd.f32 %v1100, %v1405
    %v1410 = vadd.f32 %v1101, %v1406
    %v1411 = vadd.f32 %v1102, %v1407
    %v1412 = vmax.f32 %v1408, 0.0
    %v1413 = vmax.f32 %v1409, 0.0
    %v1414 = vmax.f32 %v1410, 0.0
    %v1415 = vmax.f32 %v1411, 0.0
    %1416 = vst [vmem:[#allocation7] sm:$0xff] %v1412
    %1417 = vst [vmem:[#allocation7 + $0x8] sm:$0xff] %v1413
    %1418 = vst [vmem:[#allocation7 + $0x10] sm:$0xff] %v1414
    %1419 = vst [vmem:[#allocation7 + $0x18] sm:$0xff] %v1415
    %1420 = vst [vmem:[#allocation8] sm:$0xff] %v1099
    %1421 = vst [vmem:[#allocation8 + $0x8] sm:$0xff] %v1100
    %1422 = vst [vmem:[#allocation8 + $0x10] sm:$0xff] %v1101
    %1423 = vst [vmem:[#allocation8 + $0x18] sm:$0xff] %v1102
    // Predicated region
    $region38: #{tpu_custom_call.1} parent=1 // pred_check
      _
    $region39: #{tpu_custom_call.1} parent=1 // pred_check_branch
      %1425 = sbr.rel (0) target = $region41
    $region40: #{tpu_custom_call.1} parent=1 // pred_region
      %s1427 = ssub.s32 512, 512
      %1428 = vsyncadd [#allocation4], %s1427
      %s1429 = sshll.u32 [#allocation7], 4
      %s1430 = int_to_ptr.vmem [resolvable:$true] %s1429
      %1435 = dma.vmem_to_hbm [thread:$0]  %s1430, 512, %s7, [#allocation4], 128, 128, 8
    $region41: #{tpu_custom_call.1} parent=1 // pred_fallthru
      _
    // Predicated region
    $region42: #{tpu_custom_call.1} parent=1 // pred_check
      _
    $region43: #{tpu_custom_call.1} parent=1 // pred_check_branch
      %1437 = sbr.rel (0) target = $region45
    $region44: #{tpu_custom_call.1} parent=1 // pred_region
      %s1439 = ssub.s32 512, 512
      %1440 = vsyncadd [#allocation9], %s1439
      %s1441 = sshll.u32 [#allocation8], 4
      %s1442 = int_to_ptr.vmem [resolvable:$true] %s1441
      %1447 = dma.vmem_to_hbm [thread:$0]  %s1442, 512, %s8, [#allocation9], 128, 128, 8
    $region45: #{tpu_custom_call.1} parent=1 // pred_fallthru
      _
    // Predicated region
    $region46: #{tpu_custom_call.1} parent=1 // pred_check
      _
    $region47: #{tpu_custom_call.1} parent=1 // pred_check_branch
      %1449 = sbr.rel (0) target = $region49
    $region48: #{tpu_custom_call.1} parent=1 // pred_region
      %1450 = dma.done [#allocation4], 512
    $region49: #{tpu_custom_call.1} parent=1 // pred_fallthru
      _
    // Predicated region
    $region50: #{tpu_custom_call.1} parent=1 // pred_check
      _
    $region51: #{tpu_custom_call.1} parent=1 // pred_check_branch
      %1452 = sbr.rel (0) target = $region53
    $region52: #{tpu_custom_call.1} parent=1 // pred_region
      %1453 = dma.done [#allocation9], 512
    $region53: #{tpu_custom_call.1} parent=1 // pred_fallthru
      _
    %1454 = vsyncpa [#allocation3], 1
    %1455 = vsyncpa [#allocation6], 1
    %1456 = vsyncpa [#allocation4], 1
    %1457 = vsyncpa [#allocation9], 1

</llo_original>
